<compile_context>
chip_gen: v7x
topology: tpu7x:2x2x1
jax: 0.10.0
libtpu: 0.0.40
codegen_flags: <defaults>
</compile_context>

<pallas_src>
import jax
import jax.numpy as jnp
from jax.experimental import pallas as pl
from jax.experimental.pallas import tpu as pltpu


def _round_up(x: int, m: int) -> int:
    return (x + m - 1) // m * m


def mlp_kernel(x_ref, w1_ref, b1_ref, w2_ref, b2_ref, o_ref):
    # fc1: bf16 operands into the MXU, f32 accumulation.
    x = x_ref[...].astype(w1_ref.dtype)
    h = jnp.dot(x, w1_ref[...], preferred_element_type=jnp.float32)
    # Bias add + ReLU epilogue kept in f32 on the VPU.
    h = jnp.maximum(h + b1_ref[...], 0.0)
    # fc2: downcast the f32 accumulator to bf16 for the MXU
    # (conscious precision choice; accumulation stays f32).
    y = jnp.dot(h.astype(w2_ref.dtype), w2_ref[...],
                preferred_element_type=jnp.float32)
    o_ref[...] = (y + b2_ref[...]).astype(o_ref.dtype)


def prepare_params(w1, b1, w2, b2, *, mxu_dtype=jnp.bfloat16):
    """One-time parameter prep, hoisted out of the per-step forward.

    PyTorch nn.Linear stores W as [out, in]; transpose to [in, out] so the
    kernel matmuls are lane-dense x @ W.  Only the HIDDEN dim is zero-padded
    to a multiple of 128 lanes; the output dim keeps its true size so the
    kernel stores only useful bytes and the wrapper never slices the output.
    Weights are cast to bf16 for the MXU; biases stay f32.
    """
    hidden, in_dim = w1.shape
    out_dim, hidden2 = w2.shape
    assert hidden2 == hidden
    hp = _round_up(hidden, 128)

    w1_t = jnp.zeros((in_dim, hp), mxu_dtype).at[:, :hidden].set(
        w1.T.astype(mxu_dtype))
    b1_p = jnp.zeros((1, hp), jnp.float32).at[:, :hidden].set(
        b1.astype(jnp.float32))
    w2_t = jnp.zeros((hp, out_dim), mxu_dtype).at[:hidden, :].set(
        w2.T.astype(mxu_dtype))
    b2_p = b2.reshape(1, out_dim).astype(jnp.float32)
    return w1_t, b1_p, w2_t, b2_p


def _mlp_pallas_call(x, w1_t, b1_p, w2_t, b2_p, *, batch_tile, grid,
                     vmem_limit, cost, weight_mode):
    B, in_dim = x.shape
    hp = w1_t.shape[1]
    out_dim = w2_t.shape[1]
    wkw = {} if weight_mode is None else {"pipeline_mode": weight_mode}
    return pl.pallas_call(
        mlp_kernel,
        out_shape=jax.ShapeDtypeStruct((B, out_dim), jnp.float32),
        grid_spec=pltpu.PrefetchScalarGridSpec(
            num_scalar_prefetch=0,
            grid=grid,
            in_specs=[
                # Batch-tiled activations (double-buffered by default).
                pl.BlockSpec((batch_tile, in_dim), lambda i: (i, 0)),
                # Grid-invariant weights/biases: single resident buffer.
                pl.BlockSpec((in_dim, hp), lambda i: (0, 0), **wkw),
                pl.BlockSpec((1, hp), lambda i: (0, 0), **wkw),
                pl.BlockSpec((hp, out_dim), lambda i: (0, 0), **wkw),
                pl.BlockSpec((1, out_dim), lambda i: (0, 0), **wkw),
            ],
            # True out_dim (no lane padding): minimal write-back bytes and no
            # wrapper slice; partial tail batch block is masked by Pallas.
            out_specs=pl.BlockSpec((batch_tile, out_dim), lambda i: (i, 0)),
        ),
        compiler_params=pltpu.CompilerParams(
            dimension_semantics=("parallel",),
            vmem_limit_bytes=vmem_limit,
        ),
        cost_estimate=cost,
    )(x, w1_t, b1_p, w2_t, b2_p)


def simple_mlp_forward(x, w1_t, b1_p, w2_t, b2_p, *, batch_tile=1024):
    """x: [B, in] f32; params from prepare_params. Returns [B, out_dim] f32."""
    B, in_dim = x.shape
    hp = w1_t.shape[1]
    out_dim = w2_t.shape[1]
    assert w1_t.shape[0] == in_dim and w2_t.shape == (hp, out_dim)
    assert b1_p.shape == (1, hp) and b2_p.shape == (1, out_dim)

    # Batch tile: multiple of 16 (bf16 sublane packing), big by default to
    # amortize the ~0.35us per-step overhead and keep DMAs near the HBM
    # roofline, clamped so the grid has >= 2 steps whenever B allows it so
    # v7x's two TensorCores both run (harmless on 1-TC v5e/v6e).
    batch_tile = max(16, _round_up(min(batch_tile, _round_up(B, 16)), 16))
    if B >= 32:
        batch_tile = min(batch_tile, _round_up(pl.cdiv(B, 2), 16))
    grid = (pl.cdiv(B, batch_tile),)
    # No jnp.pad of x: Pallas masks out-of-bounds rows of the last block on
    # store, and rows are independent, so tail garbage never reaches HBM.

    w_itemsize = jnp.dtype(w1_t.dtype).itemsize
    x_itemsize = jnp.dtype(x.dtype).itemsize
    # Rough per-pipeline VMEM need: double-buffered x & out tiles, single
    # resident weight/bias buffers, f32 temporaries.
    est = (2 * batch_tile * in_dim * x_itemsize
           + 2 * batch_tile * out_dim * 4
           + (w1_t.size + w2_t.size) * w_itemsize
           + (b1_p.size + b2_p.size) * 4
           + batch_tile * (hp + out_dim) * 4)
    try:
        phys_vmem = int(pltpu.get_tpu_info().vmem_capacity_bytes)
    except Exception:
        phys_vmem = 64 * 2 ** 20  # conservative: v7x per-TC VMEM
    # ~65% of physical leaves headroom for Mosaic internal scratch on every
    # generation (v7x: 64 MiB, v5e/v6e: 128 MiB).
    vmem_limit = int(max(16 * 2 ** 20, min(4 * est, int(0.65 * phys_vmem))))

    cost = pl.CostEstimate(
        flops=2 * B * (in_dim * hp + hp * out_dim),
        transcendentals=0,
        bytes_accessed=(B * in_dim * x_itemsize
                        + (w1_t.size + w2_t.size) * w_itemsize
                        + (b1_p.size + b2_p.size) * 4
                        + B * out_dim * 4),
    )

    kwargs = dict(batch_tile=batch_tile, grid=grid, vmem_limit=vmem_limit,
                  cost=cost)
    try:
        out = _mlp_pallas_call(x, w1_t, b1_p, w2_t, b2_p,
                               weight_mode=pl.Buffered(1), **kwargs)
        return jax.block_until_ready(out)
    except Exception:
        # Fallback for jax versions without pipeline_mode / Buffered(1):
        # default double-buffering (slightly more VMEM, identical results).
        out = _mlp_pallas_call(x, w1_t, b1_p, w2_t, b2_p,
                               weight_mode=None, **kwargs)
        return jax.block_until_ready(out)


if __name__ == "__main__":
    # Small shapes consistent with the module: input_size=32, hidden=64, out=16.
    # Batch 200 -> tile 112, a 2-step "parallel" grid (v7x megacore) and a
    # partial tail block (exercises Pallas edge-block masking, no jnp.pad).
    batch, input_size, hidden_size, output_size = 200, 32, 64, 16

    key = jax.random.PRNGKey(0)
    kx, kw1, kb1, kw2, kb2 = jax.random.split(key, 5)

    # Deterministic synthetic parameters (PyTorch nn.Linear shapes: W is [out, in]).
    bound1 = 1.0 / (input_size ** 0.5)
    bound2 = 1.0 / (hidden_size ** 0.5)
    w1 = jax.random.uniform(kw1, (hidden_size, input_size), jnp.float32, -bound1, bound1)
    b1 = jax.random.uniform(kb1, (hidden_size,), jnp.float32, -bound1, bound1)
    w2 = jax.random.uniform(kw2, (output_size, hidden_size), jnp.float32, -bound2, bound2)
    b2 = jax.random.uniform(kb2, (output_size,), jnp.float32, -bound2, bound2)

    x = jax.random.normal(kx, (batch, input_size), jnp.float32)

    # One-time param prep (transpose + pad hidden to 128 lanes + bf16 cast).
    params = prepare_params(w1, b1, w2, b2)

    out = simple_mlp_forward(x, *params)
    out = jax.block_until_ready(out)

    # Pure-JAX f32 reference check (tolerance accounts for bf16 MXU operands).
    ref = jnp.maximum(x @ w1.T + b1, 0.0) @ w2.T + b2
    assert out.shape == (batch, output_size)
    assert jnp.allclose(out, ref, atol=5e-2, rtol=5e-2), "mismatch vs reference"

    print("KERNEL_OK")
</pallas_src>

<mosaic_0001>
module attributes {stable_mosaic.version = 11 : i64} {
  func.func @mlp_kernel(%arg0: i32, %arg1: memref<112x32xf32, #tpu.memory_space<vmem>>, %arg2: memref<32x128xbf16, #tpu.memory_space<vmem>>, %arg3: memref<1x128xf32, #tpu.memory_space<vmem>>, %arg4: memref<128x16xbf16, #tpu.memory_space<vmem>>, %arg5: memref<1x16xf32, #tpu.memory_space<vmem>>, %arg6: memref<112x16xf32, #tpu.memory_space<vmem>>) attributes {dimension_semantics = [#tpu.dimension_semantics<parallel>], iteration_bounds = array<i64: 2>, scalar_prefetch = 0 : i64, scratch_operands = 0 : i64, tpu.core_type = #tpu.core_type<tc>, window_params = [{transform_indices = @transform_0, window_bounds = array<i64: 112, 32>}, {pipeline_mode = #tpu.pipeline_mode<synchronous>, transform_indices = @transform_1, window_bounds = array<i64: 32, 128>}, {pipeline_mode = #tpu.pipeline_mode<synchronous>, transform_indices = @transform_2, window_bounds = array<i64: 1, 128>}, {pipeline_mode = #tpu.pipeline_mode<synchronous>, transform_indices = @transform_3, window_bounds = array<i64: 128, 16>}, {pipeline_mode = #tpu.pipeline_mode<synchronous>, transform_indices = @transform_4, window_bounds = array<i64: 1, 16>}, {transform_indices = @transform_5, window_bounds = array<i64: 112, 16>}]} {
    %c0 = arith.constant 0 : index
    %c0_0 = arith.constant 0 : index
    %0 = vector.load %arg1[%c0, %c0_0] : memref<112x32xf32, #tpu.memory_space<vmem>>, vector<112x32xf32>
    %1 = arith.truncf %0 : vector<112x32xf32> to vector<112x32xbf16>
    %c0_1 = arith.constant 0 : index
    %c0_2 = arith.constant 0 : index
    %2 = vector.load %arg2[%c0_1, %c0_2] : memref<32x128xbf16, #tpu.memory_space<vmem>>, vector<32x128xbf16>
    %cst = arith.constant dense<0.000000e+00> : vector<112x128xf32>
    %3 = tpu.matmul %1, %2, %cst {dimension_numbers = #tpu.dot_dimension_numbers<[1], [0], [0], [1], [0, 0, 1, 1], [], []>} : vector<112x32xbf16>, vector<32x128xbf16>, vector<112x128xf32> -> vector<112x128xf32>
    %c0_3 = arith.constant 0 : index
    %c0_4 = arith.constant 0 : index
    %4 = vector.load %arg3[%c0_3, %c0_4] : memref<1x128xf32, #tpu.memory_space<vmem>>, vector<1x128xf32>
    %5 = vector.broadcast %4 : vector<1x128xf32> to vector<112x128xf32>
    %6 = arith.addf %3, %5 : vector<112x128xf32>
    %cst_5 = arith.constant 0.000000e+00 : f32
    %7 = vector.broadcast %cst_5 : f32 to vector<112x128xf32>
    %8 = arith.maximumf %6, %7 : vector<112x128xf32>
    %9 = arith.truncf %8 : vector<112x128xf32> to vector<112x128xbf16>
    %c0_6 = arith.constant 0 : index
    %c0_7 = arith.constant 0 : index
    %10 = vector.load %arg4[%c0_6, %c0_7] : memref<128x16xbf16, #tpu.memory_space<vmem>>, vector<128x16xbf16>
    %cst_8 = arith.constant dense<0.000000e+00> : vector<112x16xf32>
    %11 = tpu.matmul %9, %10, %cst_8 {dimension_numbers = #tpu.dot_dimension_numbers<[1], [0], [0], [1], [0, 0, 1, 1], [], []>} : vector<112x128xbf16>, vector<128x16xbf16>, vector<112x16xf32> -> vector<112x16xf32>
    %c0_9 = arith.constant 0 : index
    %c0_10 = arith.constant 0 : index
    %12 = vector.load %arg5[%c0_9, %c0_10] : memref<1x16xf32, #tpu.memory_space<vmem>>, vector<1x16xf32>
    %13 = vector.broadcast %12 : vector<1x16xf32> to vector<112x16xf32>
    %14 = arith.addf %11, %13 : vector<112x16xf32>
    %c0_11 = arith.constant 0 : index
    %c0_12 = arith.constant 0 : index
    %15 = vector.load %arg6[%c0_11, %c0_12] : memref<112x16xf32, #tpu.memory_space<vmem>>, vector<112x16xf32>
    tpu.vector_store %arg6[%c0_11, %c0_12], %14 {strides = array<i32>} : memref<112x16xf32, #tpu.memory_space<vmem>>, vector<112x16xf32>,
    return
  }
  func.func @transform_0(%arg0: i32) -> (i32, i32) {
    %c0_i32 = arith.constant 0 : i32
    %c0_i32_0 = arith.constant 0 : i32
    return %arg0, %c0_i32 : i32, i32
  }
  func.func @transform_1(%arg0: i32) -> (i32, i32) {
    %c0_i32 = arith.constant 0 : i32
    %c0_i32_0 = arith.constant 0 : i32
    %c0_i32_1 = arith.constant 0 : i32
    return %c0_i32, %c0_i32_0 : i32, i32
  }
  func.func @transform_2(%arg0: i32) -> (i32, i32) {
    %c0_i32 = arith.constant 0 : i32
    %c0_i32_0 = arith.constant 0 : i32
    %c0_i32_1 = arith.constant 0 : i32
    return %c0_i32, %c0_i32_0 : i32, i32
  }
  func.func @transform_3(%arg0: i32) -> (i32, i32) {
    %c0_i32 = arith.constant 0 : i32
    %c0_i32_0 = arith.constant 0 : i32
    %c0_i32_1 = arith.constant 0 : i32
    return %c0_i32, %c0_i32_0 : i32, i32
  }
  func.func @transform_4(%arg0: i32) -> (i32, i32) {
    %c0_i32 = arith.constant 0 : i32
    %c0_i32_0 = arith.constant 0 : i32
    %c0_i32_1 = arith.constant 0 : i32
    return %c0_i32, %c0_i32_0 : i32, i32
  }
  func.func @transform_5(%arg0: i32) -> (i32, i32) {
    %c0_i32 = arith.constant 0 : i32
    %c0_i32_0 = arith.constant 0 : i32
    return %arg0, %c0_i32 : i32, i32
  }
}

module attributes {stable_mosaic.version = 11 : i64} {
  func.func @mlp_kernel(%arg0: i32, %arg1: memref<112x32xf32, #tpu.memory_space<vmem>>, %arg2: memref<32x128xbf16, #tpu.memory_space<vmem>>, %arg3: memref<1x128xf32, #tpu.memory_space<vmem>>, %arg4: memref<128x16xbf16, #tpu.memory_space<vmem>>, %arg5: memref<1x16xf32, #tpu.memory_space<vmem>>, %arg6: memref<112x16xf32, #tpu.memory_space<vmem>>) attributes {dimension_semantics = [#tpu.dimension_semantics<parallel>], iteration_bounds = array<i64: 2>, scalar_prefetch = 0 : i64, scratch_operands = 0 : i64, tpu.core_type = #tpu.core_type<tc>, window_params = [{transform_indices = @transform_0, window_bounds = array<i64: 112, 32>}, {pipeline_mode = #tpu.pipeline_mode<synchronous>, transform_indices = @transform_1, window_bounds = array<i64: 32, 128>}, {pipeline_mode = #tpu.pipeline_mode<synchronous>, transform_indices = @transform_2, window_bounds = array<i64: 1, 128>}, {pipeline_mode = #tpu.pipeline_mode<synchronous>, transform_indices = @transform_3, window_bounds = array<i64: 128, 16>}, {pipeline_mode = #tpu.pipeline_mode<synchronous>, transform_indices = @transform_4, window_bounds = array<i64: 1, 16>}, {transform_indices = @transform_5, window_bounds = array<i64: 112, 16>}]} {
    %c0 = arith.constant 0 : index
    %c0_0 = arith.constant 0 : index
    %0 = vector.load %arg1[%c0, %c0_0] : memref<112x32xf32, #tpu.memory_space<vmem>>, vector<112x32xf32>
    %1 = arith.truncf %0 : vector<112x32xf32> to vector<112x32xbf16>
    %c0_1 = arith.constant 0 : index
    %c0_2 = arith.constant 0 : index
    %2 = vector.load %arg2[%c0_1, %c0_2] : memref<32x128xbf16, #tpu.memory_space<vmem>>, vector<32x128xbf16>
    %cst = arith.constant dense<0.000000e+00> : vector<112x128xf32>
    %3 = tpu.matmul %1, %2, %cst {dimension_numbers = #tpu.dot_dimension_numbers<[1], [0], [0], [1], [0, 0, 1, 1], [], []>} : vector<112x32xbf16>, vector<32x128xbf16>, vector<112x128xf32> -> vector<112x128xf32>
    %c0_3 = arith.constant 0 : index
    %c0_4 = arith.constant 0 : index
    %4 = vector.load %arg3[%c0_3, %c0_4] : memref<1x128xf32, #tpu.memory_space<vmem>>, vector<1x128xf32>
    %5 = vector.broadcast %4 : vector<1x128xf32> to vector<112x128xf32>
    %6 = arith.addf %3, %5 : vector<112x128xf32>
    %cst_5 = arith.constant 0.000000e+00 : f32
    %7 = vector.broadcast %cst_5 : f32 to vector<112x128xf32>
    %8 = arith.maximumf %6, %7 : vector<112x128xf32>
    %9 = arith.truncf %8 : vector<112x128xf32> to vector<112x128xbf16>
    %c0_6 = arith.constant 0 : index
    %c0_7 = arith.constant 0 : index
    %10 = vector.load %arg4[%c0_6, %c0_7] : memref<128x16xbf16, #tpu.memory_space<vmem>>, vector<128x16xbf16>
    %cst_8 = arith.constant dense<0.000000e+00> : vector<112x16xf32>
    %11 = tpu.matmul %9, %10, %cst_8 {dimension_numbers = #tpu.dot_dimension_numbers<[1], [0], [0], [1], [0, 0, 1, 1], [], []>} : vector<112x128xbf16>, vector<128x16xbf16>, vector<112x16xf32> -> vector<112x16xf32>
    %c0_9 = arith.constant 0 : index
    %c0_10 = arith.constant 0 : index
    %12 = vector.load %arg5[%c0_9, %c0_10] : memref<1x16xf32, #tpu.memory_space<vmem>>, vector<1x16xf32>
    %13 = vector.broadcast %12 : vector<1x16xf32> to vector<112x16xf32>
    %14 = arith.addf %11, %13 : vector<112x16xf32>
    %c0_11 = arith.constant 0 : index
    %c0_12 = arith.constant 0 : index
    %15 = vector.load %arg6[%c0_11, %c0_12] : memref<112x16xf32, #tpu.memory_space<vmem>>, vector<112x16xf32>
    tpu.vector_store %arg6[%c0_11, %c0_12], %14 {strides = array<i32>} : memref<112x16xf32, #tpu.memory_space<vmem>>, vector<112x16xf32>,
    return
  }
  func.func @transform_0(%arg0: i32) -> (i32, i32) {
    %c0_i32 = arith.constant 0 : i32
    %c0_i32_0 = arith.constant 0 : i32
    return %arg0, %c0_i32 : i32, i32
  }
  func.func @transform_1(%arg0: i32) -> (i32, i32) {
    %c0_i32 = arith.constant 0 : i32
    %c0_i32_0 = arith.constant 0 : i32
    %c0_i32_1 = arith.constant 0 : i32
    return %c0_i32, %c0_i32_0 : i32, i32
  }
  func.func @transform_2(%arg0: i32) -> (i32, i32) {
    %c0_i32 = arith.constant 0 : i32
    %c0_i32_0 = arith.constant 0 : i32
    %c0_i32_1 = arith.constant 0 : i32
    return %c0_i32, %c0_i32_0 : i32, i32
  }
  func.func @transform_3(%arg0: i32) -> (i32, i32) {
    %c0_i32 = arith.constant 0 : i32
    %c0_i32_0 = arith.constant 0 : i32
    %c0_i32_1 = arith.constant 0 : i32
    return %c0_i32, %c0_i32_0 : i32, i32
  }
  func.func @transform_4(%arg0: i32) -> (i32, i32) {
    %c0_i32 = arith.constant 0 : i32
    %c0_i32_0 = arith.constant 0 : i32
    %c0_i32_1 = arith.constant 0 : i32
    return %c0_i32, %c0_i32_0 : i32, i32
  }
  func.func @transform_5(%arg0: i32) -> (i32, i32) {
    %c0_i32 = arith.constant 0 : i32
    %c0_i32_0 = arith.constant 0 : i32
    return %arg0, %c0_i32 : i32, i32
  }
}

</mosaic_0001>

<llo_original>
// kernel: tpu_custom_call.1
$region0: #{tpu_custom_call.1}
  #allocation0 [shape = 'u32[]', space=smem, size = 0x4, offset = 0x4, fixed_abs, tag = 'smem constant byte address 0x4 - core index']
  #allocation1 [shape = 'u32[144,128]{1,0:T(1,128)}', space=vmem, size = 0x12000, scoped, tag = 'internal scratch']
  %s0 = inlined_call_operand.vmem [shape: f32[200,32], index: 0, kind: input, shape index: {}]
  %s1 = inlined_call_operand.vmem [shape: bf16[32,128], index: 1, kind: input, shape index: {}]
  %s2 = inlined_call_operand.vmem [shape: f32[1,128], index: 2, kind: input, shape index: {}]
  %s3 = inlined_call_operand.vmem [shape: bf16[128,16], index: 3, kind: input, shape index: {}]
  %s4 = inlined_call_operand.vmem [shape: f32[1,16], index: 4, kind: input, shape index: {}]
  %s5 = inlined_call_operand.vmem [shape: f32[200,16], index: 5, kind: output, shape index: {}]
  %s6 = sld [smem:[#allocation0]]
  $region101: #{tpu_custom_call.1} parent=0
    _
  %s8 = ssub.s32 1, %s6
  %s9 = scalar_select 0, %s8, %s6
  $region1: #{tpu_custom_call.1} parent=0
    #allocation2 [shape = 'u8[114688]{0}', space=vmem, size = 0x1c000, scoped, tag = 'output window, operand 0']
    loop: start=0, step=1, limit=4
    $region2: #{tpu_custom_call.1} parent=1 // loop_pre_header
      _
    $region3: #{tpu_custom_call.1} parent=1 // loop_header
      %s11 = sphi 0, %s15
      %p12 = scmp.ge.s32.totalorder %s11, 4
      %s21 = sphi 0, %s23
      %s24 = sphi 0, %s21
      %s25 = sphi 0, %s24
      %s41 = sphi 0, %s25
      %s45 = sphi 0, %s45
      %s47 = sphi 0, %s45
      %s48 = sphi 0, %s47
      %s62 = sphi 0, %s48
      %s66 = sphi 0, %s66
      %s68 = sphi 0, %s66
      %s69 = sphi 0, %s68
      %s83 = sphi 0, %s69
      %s87 = sphi 0, %s87
      %s89 = sphi 0, %s87
      %s90 = sphi 0, %s89
      %s104 = sphi 0, %s90
      %s108 = sphi 0, %s108
      %s110 = sphi 0, %s108
      %s111 = sphi 0, %s110
      %s125 = sphi 0, %s111
      %s131 = sphi 0, %s133
      %s134 = sphi 0, %s131
      %s135 = sphi 0, %s134
      %s151 = sphi 0, %s135
    $region4: #{tpu_custom_call.1} parent=1 // loop_header_branch
      %14 = sbr.rel (%p12) target = $region8
    $region5: #{tpu_custom_call.1} parent=1 // loop_body
      %s16 = ssub.s32 %s11, 1
      %s17 = ssub.s32 %s11, 2
      %s18 = sadd.s32 %s11, 1
      %s19 = ssub.s32 %s11, %s18
      %p20 = scmp.eq.s32.totalorder %s19, 0
      %s22 = sadd.s32 %s21, 1
      %s23 = scalar_select %p20, %s21, %s22
      %p26 = pneg %p20
      %p27 = scmp.eq.s32.totalorder %s11, 1
      %p28 = por %p26, %p27
      %p29 = scmp.ne.s32.totalorder %s21, %s24
      %p30 = scmp.eq.s32.totalorder %s11, 0
      %p31 = por %p29, %p30
      %p32 = scmp.ne.s32.totalorder %s21, %s24
      %p33 = scmp.eq.s32.totalorder %s16, 1
      %p34 = por %p32, %p33
      %p35 = scmp.ne.s32.totalorder %s24, %s25
      %p36 = scmp.eq.s32.totalorder %s16, 0
      %p37 = por %p35, %p36
      %p38 = scmp.ne.s32.totalorder %s24, %s25
      %p39 = scmp.eq.s32.totalorder %s17, 1
      %p40 = por %p38, %p39
      %p42 = scmp.ne.s32.totalorder %s25, %s41
      %p43 = scmp.eq.s32.totalorder %s17, 0
      %p44 = por %p42, %p43
      %s46 = sadd.s32 %s45, 1
      %p49 = scmp.eq.s32.totalorder %s11, 1
      %p50 = scmp.ne.s32.totalorder %s45, %s47
      %p51 = scmp.eq.s32.totalorder %s11, 0
      %p52 = por %p50, %p51
      %p53 = scmp.ne.s32.totalorder %s45, %s47
      %p54 = scmp.eq.s32.totalorder %s16, 1
      %p55 = por %p53, %p54
      %p56 = scmp.ne.s32.totalorder %s47, %s48
      %p57 = scmp.eq.s32.totalorder %s16, 0
      %p58 = por %p56, %p57
      %p59 = scmp.ne.s32.totalorder %s47, %s48
      %p60 = scmp.eq.s32.totalorder %s17, 1
      %p61 = por %p59, %p60
      %p63 = scmp.ne.s32.totalorder %s48, %s62
      %p64 = scmp.eq.s32.totalorder %s17, 0
      %p65 = por %p63, %p64
      %s67 = sadd.s32 %s66, 1
      %p70 = scmp.eq.s32.totalorder %s11, 1
      %p71 = scmp.ne.s32.totalorder %s66, %s68
      %p72 = scmp.eq.s32.totalorder %s11, 0
      %p73 = por %p71, %p72
      %p74 = scmp.ne.s32.totalorder %s66, %s68
      %p75 = scmp.eq.s32.totalorder %s16, 1
      %p76 = por %p74, %p75
      %p77 = scmp.ne.s32.totalorder %s68, %s69
      %p78 = scmp.eq.s32.totalorder %s16, 0
      %p79 = por %p77, %p78
      %p80 = scmp.ne.s32.totalorder %s68, %s69
      %p81 = scmp.eq.s32.totalorder %s17, 1
      %p82 = por %p80, %p81
      %p84 = scmp.ne.s32.totalorder %s69, %s83
      %p85 = scmp.eq.s32.totalorder %s17, 0
      %p86 = por %p84, %p85
      %s88 = sadd.s32 %s87, 1
      %p91 = scmp.eq.s32.totalorder %s11, 1
      %p92 = scmp.ne.s32.totalorder %s87, %s89
      %p93 = scmp.eq.s32.totalorder %s11, 0
      %p94 = por %p92, %p93
      %p95 = scmp.ne.s32.totalorder %s87, %s89
      %p96 = scmp.eq.s32.totalorder %s16, 1
      %p97 = por %p95, %p96
      %p98 = scmp.ne.s32.totalorder %s89, %s90
      %p99 = scmp.eq.s32.totalorder %s16, 0
      %p100 = por %p98, %p99
      %p101 = scmp.ne.s32.totalorder %s89, %s90
      %p102 = scmp.eq.s32.totalorder %s17, 1
      %p103 = por %p101, %p102
      %p105 = scmp.ne.s32.totalorder %s90, %s104
      %p106 = scmp.eq.s32.totalorder %s17, 0
      %p107 = por %p105, %p106
      %s109 = sadd.s32 %s108, 1
      %p112 = scmp.eq.s32.totalorder %s11, 1
      %p113 = scmp.ne.s32.totalorder %s108, %s110
      %p114 = scmp.eq.s32.totalorder %s11, 0
      %p115 = por %p113, %p114
      %p116 = scmp.ne.s32.totalorder %s108, %s110
      %p117 = scmp.eq.s32.totalorder %s16, 1
      %p118 = por %p116, %p117
      %p119 = scmp.ne.s32.totalorder %s110, %s111
      %p120 = scmp.eq.s32.totalorder %s16, 0
      %p121 = por %p119, %p120
      %p122 = scmp.ne.s32.totalorder %s110, %s111
      %p123 = scmp.eq.s32.totalorder %s17, 1
      %p124 = por %p122, %p123
      %p126 = scmp.ne.s32.totalorder %s111, %s125
      %p127 = scmp.eq.s32.totalorder %s17, 0
      %p128 = por %p126, %p127
      %s129 = ssub.s32 %s11, %s18
      %p130 = scmp.eq.s32.totalorder %s129, 0
      %s132 = sadd.s32 %s131, 1
      %s133 = scalar_select %p130, %s131, %s132
      %p136 = pneg %p130
      %p137 = scmp.eq.s32.totalorder %s11, 1
      %p138 = por %p136, %p137
      %p139 = scmp.ne.s32.totalorder %s131, %s134
      %p140 = scmp.eq.s32.totalorder %s11, 0
      %p141 = por %p139, %p140
      %p142 = scmp.ne.s32.totalorder %s131, %s134
      %p143 = scmp.eq.s32.totalorder %s16, 1
      %p144 = por %p142, %p143
      %p145 = scmp.ne.s32.totalorder %s134, %s135
      %p146 = scmp.eq.s32.totalorder %s16, 0
      %p147 = por %p145, %p146
      %p148 = scmp.ne.s32.totalorder %s134, %s135
      %p149 = scmp.eq.s32.totalorder %s17, 1
      %p150 = por %p148, %p149
      %p152 = scmp.ne.s32.totalorder %s135, %s151
      %p153 = scmp.eq.s32.totalorder %s17, 0
      %p154 = por %p152, %p153
      %p155 = scmp.le.s32.totalorder 1, %s11
      %p156 = scmp.lt.s32.totalorder %s11, 3
      %p157 = pnand %p155, %p156
      %p158 = pneg %p157
      // Predicated region
      $region9: #{tpu_custom_call.1} parent=5 // pred_check
        _
      $region10: #{tpu_custom_call.1} parent=5 // pred_check_branch
        %160 = sbr.rel (%p157) target = $region12
      $region11: #{tpu_custom_call.1} parent=5 // pred_region
        %s161 = ssub.s32 %s11, 1
        // Predicated region
        $region13: #{tpu_custom_call.1} parent=11 // pred_check
          %p162 = pneg %p58
        $region14: #{tpu_custom_call.1} parent=11 // pred_check_branch
          %164 = sbr.rel (%p162) target = $region16
        $region15: #{tpu_custom_call.1} parent=11 // pred_region
          _
        $region16: #{tpu_custom_call.1} parent=11 // pred_fallthru
          _
        // Predicated region
        $region17: #{tpu_custom_call.1} parent=11 // pred_check
          %p165 = pneg %p79
        $region18: #{tpu_custom_call.1} parent=11 // pred_check_branch
          %167 = sbr.rel (%p165) target = $region20
        $region19: #{tpu_custom_call.1} parent=11 // pred_region
          _
        $region20: #{tpu_custom_call.1} parent=11 // pred_fallthru
          _
        // Predicated region
        $region21: #{tpu_custom_call.1} parent=11 // pred_check
          %p168 = pneg %p100
        $region22: #{tpu_custom_call.1} parent=11 // pred_check_branch
          %170 = sbr.rel (%p168) target = $region24
        $region23: #{tpu_custom_call.1} parent=11 // pred_region
          _
        $region24: #{tpu_custom_call.1} parent=11 // pred_fallthru
          _
        // Predicated region
        $region25: #{tpu_custom_call.1} parent=11 // pred_check
          %p171 = pneg %p121
        $region26: #{tpu_custom_call.1} parent=11 // pred_check_branch
          %173 = sbr.rel (%p171) target = $region28
        $region27: #{tpu_custom_call.1} parent=11 // pred_region
          _
        $region28: #{tpu_custom_call.1} parent=11 // pred_fallthru
          _
      $region12: #{tpu_custom_call.1} parent=5 // pred_fallthru
        _
      %p174 = scmp.lt.s32.totalorder %s11, 2
      // Predicated region
      $region29: #{tpu_custom_call.1} parent=5 // pred_check
        %p175 = pneg %p174
      $region30: #{tpu_custom_call.1} parent=5 // pred_check_branch
        %177 = sbr.rel (%p175) target = $region32
      $region31: #{tpu_custom_call.1} parent=5 // pred_region
        // Predicated region
        $region33: #{tpu_custom_call.1} parent=31 // pred_check
          %p178 = pneg %p31
        $region34: #{tpu_custom_call.1} parent=31 // pred_check_branch
          %180 = sbr.rel (%p178) target = $region36
        $region35: #{tpu_custom_call.1} parent=31 // pred_region
          %s181 = smul.u32 14, %s11
          %s182 = ssub.s32 25, %s181
          %p183 = scmp.lt.s32.totalorder %s182, 14
          %s184 = scalar_select %p183, %s182, 14
          %s185 = smul.u32 128, %s184
          %p186 = scmp.lt.s32.totalorder %s181, 24
          %s187 = scalar_select %p186, %s181, 24
          %s188 = smul.addr %s187, 8
          %s189 = scalar_lea.vmem %s0, %s188
          %s190 = smul.u32 14, %s11
          %s191 = ssub.s32 25, %s190
          %p192 = scmp.lt.s32.totalorder %s191, 14
          %s193 = scalar_select %p192, %s191, 14
          %s194 = smul.u32 128, %s193
        $region36: #{tpu_custom_call.1} parent=31 // pred_fallthru
          _
      $region32: #{tpu_custom_call.1} parent=5 // pred_fallthru
        _
      %p195 = scmp.le.s32.totalorder 1, %s11
      %p196 = scmp.lt.s32.totalorder %s11, 3
      %p197 = pnand %p195, %p196
      %p198 = pneg %p197
      // Predicated region
      $region37: #{tpu_custom_call.1} parent=5 // pred_check
        _
      $region38: #{tpu_custom_call.1} parent=5 // pred_check_branch
        %200 = sbr.rel (%p197) target = $region40
      $region39: #{tpu_custom_call.1} parent=5 // pred_region
        %s201 = ssub.s32 %s11, 1
        %s202 = smul.u32 14, %s16
        %s203 = ssub.s32 25, %s202
        %p204 = scmp.lt.s32.totalorder %s203, 14
        %s205 = scalar_select %p204, %s203, 14
        %s206 = smul.u32 128, %s205
        %p207 = scmp.lt.s32.totalorder %s202, 24
        %s208 = scalar_select %p207, %s202, 24
        %s209 = smul.addr %s208, 8
        %s210 = scalar_lea.vmem %s0, %s209
        %p211 = pneg %p37
        %p212 = pneg %p34
        %p213 = pneg %p58
        %p214 = pneg %p55
        %p215 = pneg %p79
        %p216 = pneg %p76
        %p217 = pneg %p100
        %p218 = pneg %p97
        %p219 = pneg %p121
        %p220 = pneg %p118
        %p221 = pneg %p147
        %p222 = pneg %p144
        %s223 = sand.u32 %s134, 1
        %s224 = sand.u32 %s134, 1
        %s225 = smul.addr %s224, 112
        %s226 = scalar_lea.vmem [#allocation2], %s225
        %s227 = smul.u32 14, %s16
        %s228 = ssub.s32 25, %s227
        %p229 = scmp.lt.s32.totalorder %s228, 14
        %s230 = scalar_select %p229, %s228, 14
        %s231 = smul.u32 128, %s230
        %p232 = scmp.lt.s32.totalorder %s227, 24
        %s233 = scalar_select %p232, %s227, 24
        %s234 = smul.addr %s233, 8
        %s235 = scalar_lea.vmem %s0, %s234
        %s236 = smul.u32 14, %s16
        %s237 = ssub.s32 25, %s236
        %p238 = scmp.lt.s32.totalorder %s237, 14
        %s239 = scalar_select %p238, %s237, 14
        %s240 = smul.u32 128, %s239
        %s241 = smul.u32 14, %s16
        %s242 = ssub.s32 25, %s241
        %p243 = scmp.lt.s32.totalorder %s242, 14
        %s244 = scalar_select %p243, %s242, 14
        %s245 = smul.u32 128, %s244
        %v247 = vld [vmem:[%s235] sm:$0xff]
        %v248 = vld [vmem:[%s235 + $0x8] sm:$0xff]
        %v249 = vld [vmem:[%s235 + $0x10] sm:$0xff]
        %v250 = vld [vmem:[%s235 + $0x18] sm:$0xff]
        %v251 = vld [vmem:[%s235 + $0x20] sm:$0xff]
        %v252 = vld [vmem:[%s235 + $0x28] sm:$0xff]
        %v253 = vld [vmem:[%s235 + $0x30] sm:$0xff]
        %v254 = vld [vmem:[%s235 + $0x38] sm:$0xff]
        %v255 = vld [vmem:[%s235 + $0x40] sm:$0xff]
        %v256 = vld [vmem:[%s235 + $0x48] sm:$0xff]
        %v257 = vld [vmem:[%s235 + $0x50] sm:$0xff]
        %v258 = vld [vmem:[%s235 + $0x58] sm:$0xff]
        %v259 = vld [vmem:[%s235 + $0x60] sm:$0xff]
        %v260 = vld [vmem:[%s235 + $0x68] sm:$0xff]
        %v261 = vpack.c.bf16 %v248, %v247
        %v262 = vpack.c.bf16 %v250, %v249
        %v263 = vpack.c.bf16 %v252, %v251
        %v264 = vpack.c.bf16 %v254, %v253
        %v265 = vpack.c.bf16 %v256, %v255
        %v266 = vpack.c.bf16 %v258, %v257
        %v267 = vpack.c.bf16 %v260, %v259
        %v268 = vld [vmem:[%s1] sm:$0xf]
        %v269 = vld [vmem:[%s1 + $0x4] sm:$0xf]
        %v270 = vld [vmem:[%s1 + $0x8] sm:$0xf]
        %v271 = vld [vmem:[%s1 + $0xc] sm:$0xf]
        %v272 = vld [vmem:[%s2] sm:$0x1]
        %v274 = vlaneseq
        %v275 = vshrl.u32 %v274, 7
        %v276 = vsub.s32 0, %v275
        %v277 = vrot.slane %v272, %v276
        %v283 = vunpack.c.l.b16 %v268
        %v284 = vunpack.c.l.b16 %v269
        %v285 = vunpack.c.l.b16 %v270
        %v286 = vunpack.c.l.b16 %v271
        %v287 = vpack.c.b16 %v284, %v283
        %v288 = vpack.c.b16 %v286, %v285
        %vm291 = vcmask 261120
        %v293 = vsel %vm291, %v261, 0
        %v296 = vsel %vm291, %v262, 0
        %v299 = vsel %vm291, %v263, 0
        %v302 = vsel %vm291, %v264, 0
        %v305 = vsel %vm291, %v265, 0
        %v308 = vsel %vm291, %v266, 0
        %v311 = vsel %vm291, %v267, 0
        %313 = vmatprep.subr.bf16.mxu0 0
        %314 = vmatpush1.bf16.msra.mxu0 %v287
        %315 = vmatprep.subr.bf16.mxu0 0
        %316 = vmatpush1.bf16.msra.mxu0 %v288
        %317 = vmatprep.subr.bf16.mxu0 0
        %318 = vmatpush1.bf16.msra.mxu0 0
        %319 = vmatprep.subr.bf16.mxu0 0
        %320 = vmatpush1.bf16.msra.mxu0 0
        %321 = vmatprep.subr.bf16.mxu0 0
        %322 = vmatpush1.bf16.msra.mxu0 0
        %323 = vmatprep.subr.bf16.mxu0 0
        %324 = vmatpush1.bf16.msra.mxu0 0
        %325 = vmatprep.subr.bf16.mxu0 0
        %326 = vmatpush1.bf16.msra.mxu0 0
        %327 = vmatprep.subr.bf16.mxu0 0
        %328 = vmatpush1.bf16.msra.mxu0 0
        %329 = vmatprep.subr.bf16.mxu0 0
        %330 = vmatpush1.bf16.msra.mxu0 0
        %331 = vmatprep.subr.bf16.mxu0 0
        %332 = vmatpush1.bf16.msra.mxu0 0
        %333 = vmatprep.subr.bf16.mxu0 0
        %334 = vmatpush1.bf16.msra.mxu0 0
        %335 = vmatprep.subr.bf16.mxu0 0
        %336 = vmatpush1.bf16.msra.mxu0 0
        %337 = vmatprep.subr.bf16.mxu0 0
        %338 = vmatpush1.bf16.msra.mxu0 0
        %339 = vmatprep.subr.bf16.mxu0 0
        %340 = vmatpush1.bf16.msra.mxu0 0
        %341 = vmatprep.subr.bf16.mxu0 0
        %342 = vmatpush1.bf16.msra.mxu0 0
        %343 = vmatprep.subr.bf16.mxu0 0
        %344 = vmatpush1.bf16.msra.mxu0 0
        %345 = vmatprep.mubr.bf16.mxu0 0
        %346 = vmatmul.mubr.bf16.gmra.mrb[0].mxu0 %v293
        %v347 = vpop.f32.mrb[0].mxu0
        %v348 = vadd.f32 %v277, %v347
        %v349 = vpop.f32.mrb[0].mxu0
        %v350 = vpop.f32.mrb[0].mxu0
        %v351 = vadd.f32 %v277, %v350
        %v352 = vpop.f32.mrb[0].mxu0
        %353 = vmatprep.mubr.bf16.mxu0 0
        %354 = vmatmul.mubr.bf16.gmra.mrb[0].mxu0 %v296
        %v355 = vpop.f32.mrb[0].mxu0
        %v356 = vadd.f32 %v277, %v355
        %v357 = vpop.f32.mrb[0].mxu0
        %v358 = vpop.f32.mrb[0].mxu0
        %v359 = vadd.f32 %v277, %v358
        %v360 = vpop.f32.mrb[0].mxu0
        %361 = vmatprep.mubr.bf16.mxu0 0
        %362 = vmatmul.mubr.bf16.gmra.mrb[0].mxu0 %v299
        %v363 = vpop.f32.mrb[0].mxu0
        %v364 = vadd.f32 %v277, %v363
        %v365 = vpop.f32.mrb[0].mxu0
        %v366 = vpop.f32.mrb[0].mxu0
        %v367 = vadd.f32 %v277, %v366
        %v368 = vpop.f32.mrb[0].mxu0
        %369 = vmatprep.mubr.bf16.mxu0 0
        %370 = vmatmul.mubr.bf16.gmra.mrb[0].mxu0 %v302
        %v371 = vpop.f32.mrb[0].mxu0
        %v372 = vadd.f32 %v277, %v371
        %v373 = vpop.f32.mrb[0].mxu0
        %v374 = vpop.f32.mrb[0].mxu0
        %v375 = vadd.f32 %v277, %v374
        %v376 = vpop.f32.mrb[0].mxu0
        %377 = vmatprep.mubr.bf16.mxu0 0
        %378 = vmatmul.mubr.bf16.gmra.mrb[0].mxu0 %v305
        %v379 = vpop.f32.mrb[0].mxu0
        %v380 = vadd.f32 %v277, %v379
        %v381 = vpop.f32.mrb[0].mxu0
        %v382 = vpop.f32.mrb[0].mxu0
        %v383 = vadd.f32 %v277, %v382
        %v384 = vpop.f32.mrb[0].mxu0
        %385 = vmatprep.mubr.bf16.mxu0 0
        %386 = vmatmul.mubr.bf16.gmra.mrb[0].mxu0 %v308
        %v387 = vpop.f32.mrb[0].mxu0
        %v388 = vadd.f32 %v277, %v387
        %v389 = vpop.f32.mrb[0].mxu0
        %v390 = vpop.f32.mrb[0].mxu0
        %v391 = vadd.f32 %v277, %v390
        %v392 = vpop.f32.mrb[0].mxu0
        %393 = vmatprep.mubr.bf16.mxu0 0
        %394 = vmatmul.mubr.bf16.gmra.mrb[0].mxu0 %v311
        %v395 = vpop.f32.mrb[0].mxu0
        %v396 = vadd.f32 %v277, %v395
        %v397 = vpop.f32.mrb[0].mxu0
        %v398 = vpop.f32.mrb[0].mxu0
        %v399 = vadd.f32 %v277, %v398
        %v400 = vpop.f32.mrb[0].mxu0
        %401 = vdwg.mxu0
        %v402 = vmax.f32 %v348, 0.0
        %v403 = vmax.f32 %v351, 0.0
        %v404 = vmax.f32 %v356, 0.0
        %v405 = vmax.f32 %v359, 0.0
        %v406 = vmax.f32 %v364, 0.0
        %v407 = vmax.f32 %v367, 0.0
        %v408 = vmax.f32 %v372, 0.0
        %v409 = vmax.f32 %v375, 0.0
        %v410 = vmax.f32 %v380, 0.0
        %v411 = vmax.f32 %v383, 0.0
        %v412 = vmax.f32 %v388, 0.0
        %v413 = vmax.f32 %v391, 0.0
        %v414 = vmax.f32 %v396, 0.0
        %v415 = vmax.f32 %v399, 0.0
        %v416 = vpack.c.bf16 %v403, %v402
        %v417 = vpack.c.bf16 %v405, %v404
        %v418 = vpack.c.bf16 %v407, %v406
        %v419 = vpack.c.bf16 %v409, %v408
        %v420 = vpack.c.bf16 %v411, %v410
        %v421 = vpack.c.bf16 %v413, %v412
        %v422 = vpack.c.bf16 %v415, %v414
        %v423 = vld [vmem:[%s3] sm:$0xf]
        %v424 = vld [vmem:[%s3 + $0x4] sm:$0xf]
        %v425 = vld [vmem:[%s3 + $0x8] sm:$0xf]
        %v426 = vld [vmem:[%s3 + $0xc] sm:$0xf]
        %v427 = vld [vmem:[%s3 + $0x10] sm:$0xf]
        %v428 = vld [vmem:[%s3 + $0x14] sm:$0xf]
        %v429 = vld [vmem:[%s3 + $0x18] sm:$0xf]
        %v430 = vld [vmem:[%s3 + $0x1c] sm:$0xf]
        %v431 = vld [vmem:[%s3 + $0x20] sm:$0xf]
        %v432 = vld [vmem:[%s3 + $0x24] sm:$0xf]
        %v433 = vld [vmem:[%s3 + $0x28] sm:$0xf]
        %v434 = vld [vmem:[%s3 + $0x2c] sm:$0xf]
        %v435 = vld [vmem:[%s3 + $0x30] sm:$0xf]
        %v436 = vld [vmem:[%s3 + $0x34] sm:$0xf]
        %v437 = vld [vmem:[%s3 + $0x38] sm:$0xf]
        %v438 = vld [vmem:[%s3 + $0x3c] sm:$0xf]
        %v439 = vld [vmem:[%s4] sm:$0x1]
        %v441 = vlaneseq
        %v442 = vshrl.u32 %v441, 7
        %v443 = vsub.s32 0, %v442
        %v444 = vrot.slane %v439, %v443
        %v462 = vunpack.c.l.b16 %v423
        %v463 = vunpack.c.l.b16 %v424
        %v464 = vunpack.c.l.b16 %v425
        %v465 = vunpack.c.l.b16 %v426
        %v466 = vunpack.c.l.b16 %v427
        %v467 = vunpack.c.l.b16 %v428
        %v468 = vunpack.c.l.b16 %v429
        %v469 = vunpack.c.l.b16 %v430
        %v470 = vunpack.c.l.b16 %v431
        %v471 = vunpack.c.l.b16 %v432
        %v472 = vunpack.c.l.b16 %v433
        %v473 = vunpack.c.l.b16 %v434
        %v474 = vunpack.c.l.b16 %v435
        %v475 = vunpack.c.l.b16 %v436
        %v476 = vunpack.c.l.b16 %v437
        %v477 = vunpack.c.l.b16 %v438
        %v478 = vpack.c.b16 %v463, %v462
        %v479 = vpack.c.b16 %v465, %v464
        %v480 = vpack.c.b16 %v467, %v466
        %v481 = vpack.c.b16 %v469, %v468
        %v482 = vpack.c.b16 %v471, %v470
        %v483 = vpack.c.b16 %v473, %v472
        %v484 = vpack.c.b16 %v475, %v474
        %v485 = vpack.c.b16 %v477, %v476
        %494 = vmatprep.subr.bf16.mxu0 0
        %495 = vmatpush1.bf16.msra.mxu0 %v478
        %496 = vmatprep.subr.bf16.mxu0 0
        %497 = vmatpush1.bf16.msra.mxu0 %v479
        %498 = vmatprep.subr.bf16.mxu0 0
        %499 = vmatpush1.bf16.msra.mxu0 %v480
        %500 = vmatprep.subr.bf16.mxu0 0
        %501 = vmatpush1.bf16.msra.mxu0 %v481
        %502 = vmatprep.subr.bf16.mxu0 0
        %503 = vmatpush1.bf16.msra.mxu0 %v482
        %504 = vmatprep.subr.bf16.mxu0 0
        %505 = vmatpush1.bf16.msra.mxu0 %v483
        %506 = vmatprep.subr.bf16.mxu0 0
        %507 = vmatpush1.bf16.msra.mxu0 %v484
        %508 = vmatprep.subr.bf16.mxu0 0
        %509 = vmatpush1.bf16.msra.mxu0 %v485
        %510 = vmatprep.subr.bf16.mxu0 0
        %511 = vmatpush1.bf16.msra.mxu0 0
        %512 = vmatprep.subr.bf16.mxu0 0
        %513 = vmatpush1.bf16.msra.mxu0 0
        %514 = vmatprep.subr.bf16.mxu0 0
        %515 = vmatpush1.bf16.msra.mxu0 0
        %516 = vmatprep.subr.bf16.mxu0 0
        %517 = vmatpush1.bf16.msra.mxu0 0
        %518 = vmatprep.subr.bf16.mxu0 0
        %519 = vmatpush1.bf16.msra.mxu0 0
        %520 = vmatprep.subr.bf16.mxu0 0
        %521 = vmatpush1.bf16.msra.mxu0 0
        %522 = vmatprep.subr.bf16.mxu0 0
        %523 = vmatpush1.bf16.msra.mxu0 0
        %524 = vmatprep.subr.bf16.mxu0 0
        %525 = vmatpush1.bf16.msra.mxu0 0
        %526 = vmatprep.mubr.bf16.mxu0 0
        %527 = vmatmul.mubr.bf16.gmra.mrb[0].mxu0 %v416
        %v528 = vpop.f32.mrb[0].mxu0
        %v529 = vadd.f32 %v444, %v528
        %v530 = vpop.f32.mrb[0].mxu0
        %v531 = vpop.f32.mrb[0].mxu0
        %v532 = vadd.f32 %v444, %v531
        %v533 = vpop.f32.mrb[0].mxu0
        %534 = vmatprep.mubr.bf16.mxu0 0
        %535 = vmatmul.mubr.bf16.gmra.mrb[0].mxu0 %v417
        %v536 = vpop.f32.mrb[0].mxu0
        %v537 = vadd.f32 %v444, %v536
        %v538 = vpop.f32.mrb[0].mxu0
        %v539 = vpop.f32.mrb[0].mxu0
        %v540 = vadd.f32 %v444, %v539
        %v541 = vpop.f32.mrb[0].mxu0
        %542 = vmatprep.mubr.bf16.mxu0 0
        %543 = vmatmul.mubr.bf16.gmra.mrb[0].mxu0 %v418
        %v544 = vpop.f32.mrb[0].mxu0
        %v545 = vadd.f32 %v444, %v544
        %v546 = vpop.f32.mrb[0].mxu0
        %v547 = vpop.f32.mrb[0].mxu0
        %v548 = vadd.f32 %v444, %v547
        %v549 = vpop.f32.mrb[0].mxu0
        %550 = vmatprep.mubr.bf16.mxu0 0
        %551 = vmatmul.mubr.bf16.gmra.mrb[0].mxu0 %v419
        %v552 = vpop.f32.mrb[0].mxu0
        %v553 = vadd.f32 %v444, %v552
        %v554 = vpop.f32.mrb[0].mxu0
        %v555 = vpop.f32.mrb[0].mxu0
        %v556 = vadd.f32 %v444, %v555
        %v557 = vpop.f32.mrb[0].mxu0
        %558 = vmatprep.mubr.bf16.mxu0 0
        %559 = vmatmul.mubr.bf16.gmra.mrb[0].mxu0 %v420
        %v560 = vpop.f32.mrb[0].mxu0
        %v561 = vadd.f32 %v444, %v560
        %v562 = vpop.f32.mrb[0].mxu0
        %v563 = vpop.f32.mrb[0].mxu0
        %v564 = vadd.f32 %v444, %v563
        %v565 = vpop.f32.mrb[0].mxu0
        %566 = vmatprep.mubr.bf16.mxu0 0
        %567 = vmatmul.mubr.bf16.gmra.mrb[0].mxu0 %v421
        %v568 = vpop.f32.mrb[0].mxu0
        %v569 = vadd.f32 %v444, %v568
        %v570 = vpop.f32.mrb[0].mxu0
        %v571 = vpop.f32.mrb[0].mxu0
        %v572 = vadd.f32 %v444, %v571
        %v573 = vpop.f32.mrb[0].mxu0
        %574 = vmatprep.mubr.bf16.mxu0 0
        %575 = vmatmul.mubr.bf16.gmra.mrb[0].mxu0 %v422
        %v576 = vpop.f32.mrb[0].mxu0
        %v577 = vadd.f32 %v444, %v576
        %v578 = vpop.f32.mrb[0].mxu0
        %v579 = vpop.f32.mrb[0].mxu0
        %v580 = vadd.f32 %v444, %v579
        %v581 = vpop.f32.mrb[0].mxu0
        %582 = vdwg.mxu0
        %vm583 = vcmask 130048
        %584 = vst.msk [vmem:[%s226] sm:$0xff] %vm583, %v529
        %585 = vst.msk [vmem:[%s226 + $0x8] sm:$0xff] %vm583, %v532
        %586 = vst.msk [vmem:[%s226 + $0x10] sm:$0xff] %vm583, %v537
        %587 = vst.msk [vmem:[%s226 + $0x18] sm:$0xff] %vm583, %v540
        %588 = vst.msk [vmem:[%s226 + $0x20] sm:$0xff] %vm583, %v545
        %589 = vst.msk [vmem:[%s226 + $0x28] sm:$0xff] %vm583, %v548
        %590 = vst.msk [vmem:[%s226 + $0x30] sm:$0xff] %vm583, %v553
        %591 = vst.msk [vmem:[%s226 + $0x38] sm:$0xff] %vm583, %v556
        %592 = vst.msk [vmem:[%s226 + $0x40] sm:$0xff] %vm583, %v561
        %593 = vst.msk [vmem:[%s226 + $0x48] sm:$0xff] %vm583, %v564
        %594 = vst.msk [vmem:[%s226 + $0x50] sm:$0xff] %vm583, %v569
        %595 = vst.msk [vmem:[%s226 + $0x58] sm:$0xff] %vm583, %v572
        %596 = vst.msk [vmem:[%s226 + $0x60] sm:$0xff] %vm583, %v577
        %597 = vst.msk [vmem:[%s226 + $0x68] sm:$0xff] %vm583, %v580
        %s598 = sand.u32 %s134, 1
        %s599 = sand.u32 %s134, 1
        %s600 = smul.addr %s599, 112
        %s601 = scalar_lea.vmem [#allocation2], %s600
        // Predicated region
        $region41: #{tpu_custom_call.1} parent=39 // pred_check
          %p602 = pneg %p144
        $region42: #{tpu_custom_call.1} parent=39 // pred_check_branch
          %604 = sbr.rel (%p602) target = $region44
        $region43: #{tpu_custom_call.1} parent=39 // pred_region
          %s605 = smul.u32 14, %s16
          %s606 = ssub.s32 25, %s605
          %p607 = scmp.lt.s32.totalorder %s606, 14
          %s608 = scalar_select %p607, %s606, 14
          %s609 = smul.u32 128, %s608
          %p610 = scmp.ne.s32.totalorder 0, %s609
          %s611 = smul.addr %s605, 8
          %s612 = scalar_lea.vmem %s5, %s611
          // Predicated region
          $region45: #{tpu_custom_call.1} parent=43 // pred_check
            %p613 = pneg %p610
          $region46: #{tpu_custom_call.1} parent=43 // pred_check_branch
            %615 = sbr.rel (%p613) target = $region48
          $region47: #{tpu_custom_call.1} parent=43 // pred_region
            // Predicated region
            $region49: #{tpu_custom_call.1} parent=47 // pred_check
              _
            $region50: #{tpu_custom_call.1} parent=47 // pred_check_branch
              %617 = sbr.rel (0) target = $region52
            $region51: #{tpu_custom_call.1} parent=47 // pred_region
              // Predicated region
              $region71: #{tpu_custom_call.1} parent=51 // pred_check
                _
              $region72: #{tpu_custom_call.1} parent=51 // pred_check_branch
                %693 = sbr.rel (0) target = $region74
              $region73: #{tpu_custom_call.1} parent=51 // pred_region
                %s694 = sdiv.u32.pop %s608, 14
                %s695 = srem.u32.pop %s608, 14
                // While loop
                $region75: #{tpu_custom_call.1} parent=73 // loop_pre_header
                  _
                $region76: #{tpu_custom_call.1} parent=73 // loop_header
                  %s697 = sphi 0, %s699
                  %p698 = scmp.ge.s32.totalorder %s697, %s694
                  %s702 = sphi 0, %s735
                  %s703 = sphi %s601, %s738
                  %s704 = sphi %s612, %s739
                $region77: #{tpu_custom_call.1} parent=73 // loop_header_branch
                  %701 = sbr.rel (%p698) target = $region81
                $region78: #{tpu_custom_call.1} parent=73 // loop_body
                  %v705 = vld [vmem:[%s703] sm:$0xff]
                  %706 = vst [vmem:[%s704] sm:$0xff] %v705
                  %v707 = vld [vmem:[%s703 + $0x8] sm:$0xff]
                  %708 = vst [vmem:[%s704 + $0x8] sm:$0xff] %v707
                  %v709 = vld [vmem:[%s703 + $0x10] sm:$0xff]
                  %710 = vst [vmem:[%s704 + $0x10] sm:$0xff] %v709
                  %v711 = vld [vmem:[%s703 + $0x18] sm:$0xff]
                  %712 = vst [vmem:[%s704 + $0x18] sm:$0xff] %v711
                  %v713 = vld [vmem:[%s703 + $0x20] sm:$0xff]
                  %714 = vst [vmem:[%s704 + $0x20] sm:$0xff] %v713
                  %v715 = vld [vmem:[%s703 + $0x28] sm:$0xff]
                  %716 = vst [vmem:[%s704 + $0x28] sm:$0xff] %v715
                  %v717 = vld [vmem:[%s703 + $0x30] sm:$0xff]
                  %718 = vst [vmem:[%s704 + $0x30] sm:$0xff] %v717
                  %v719 = vld [vmem:[%s703 + $0x38] sm:$0xff]
                  %720 = vst [vmem:[%s704 + $0x38] sm:$0xff] %v719
                  %v721 = vld [vmem:[%s703 + $0x40] sm:$0xff]
                  %722 = vst [vmem:[%s704 + $0x40] sm:$0xff] %v721
                  %v723 = vld [vmem:[%s703 + $0x48] sm:$0xff]
                  %724 = vst [vmem:[%s704 + $0x48] sm:$0xff] %v723
                  %v725 = vld [vmem:[%s703 + $0x50] sm:$0xff]
                  %726 = vst [vmem:[%s704 + $0x50] sm:$0xff] %v725
                  %v727 = vld [vmem:[%s703 + $0x58] sm:$0xff]
                  %728 = vst [vmem:[%s704 + $0x58] sm:$0xff] %v727
                  %v729 = vld [vmem:[%s703 + $0x60] sm:$0xff]
                  %730 = vst [vmem:[%s704 + $0x60] sm:$0xff] %v729
                  %v731 = vld [vmem:[%s703 + $0x68] sm:$0xff]
                  %732 = vst [vmem:[%s704 + $0x68] sm:$0xff] %v731
                  %s733 = sadd.s32 1, %s702
                  %p734 = scmp.ge.s32.totalorder %s733, %s694
                  %s735 = scalar_select %p734, 0, %s733
                  %s736 = smul.u32 %s735, 112
                  %s737 = smul.u32 %s735, 112
                  %s738 = scalar_lea.vmem %s601, %s736 [#allocation2]
                  %s739 = scalar_lea.vmem %s612, %s737
                $region79: #{tpu_custom_call.1} parent=73 // loop_footer
                  %s699 = sadd.s32 %s697, 1
                $region80: #{tpu_custom_call.1} parent=73 // loop_footer_branch
                  %696 = sbr.rel target = $region76
                $region81: #{tpu_custom_call.1} parent=73 // loop_exit
                  _
                %s740 = sdiv.u32.pop %s608, 14
                %s741 = srem.u32.pop %s608, 14
                %s742 = smul.u32 %s740, 14
                %s743 = smul.u32 8, %s742
                %s744 = scalar_lea.vmem %s601, %s743 [#allocation2]
                %s745 = smul.u32 8, %s742
                %s746 = scalar_lea.vmem %s612, %s745
                // While loop
                $region82: #{tpu_custom_call.1} parent=73 // loop_pre_header
                  _
                $region83: #{tpu_custom_call.1} parent=73 // loop_header
                  %s748 = sphi 0, %s750
                  %p749 = scmp.ge.s32.totalorder %s748, %s741
                  %s753 = sphi 0, %s760
                  %s754 = sphi %s744, %s763
                  %s755 = sphi %s746, %s764
                $region84: #{tpu_custom_call.1} parent=73 // loop_header_branch
                  %752 = sbr.rel (%p749) target = $region88
                $region85: #{tpu_custom_call.1} parent=73 // loop_body
                  %v756 = vld [vmem:[%s754] sm:$0xff]
                  %757 = vst [vmem:[%s755] sm:$0xff] %v756
                  %s758 = sadd.s32 1, %s753
                  %p759 = scmp.ge.s32.totalorder %s758, %s741
                  %s760 = scalar_select %p759, 0, %s758
                  %s761 = smul.u32 %s760, 8
                  %s762 = smul.u32 %s760, 8
                  %s763 = scalar_lea.vmem %s744, %s761 [#allocation2]
                  %s764 = scalar_lea.vmem %s746, %s762
                $region86: #{tpu_custom_call.1} parent=73 // loop_footer
                  %s750 = sadd.s32 %s748, 1
                $region87: #{tpu_custom_call.1} parent=73 // loop_footer_branch
                  %747 = sbr.rel target = $region83
                $region88: #{tpu_custom_call.1} parent=73 // loop_exit
                  _
              $region74: #{tpu_custom_call.1} parent=51 // pred_fallthru
                _
              // Predicated region
              $region89: #{tpu_custom_call.1} parent=51 // pred_check
                _
              $region90: #{tpu_custom_call.1} parent=51 // pred_check_branch
                %766 = sbr.rel target = $region92
              $region91: #{tpu_custom_call.1} parent=51 // pred_region
                _
              $region92: #{tpu_custom_call.1} parent=51 // pred_fallthru
                _
            $region52: #{tpu_custom_call.1} parent=47 // pred_fallthru
              _
            // Predicated region
            $region53: #{tpu_custom_call.1} parent=47 // pred_check
              _
            $region54: #{tpu_custom_call.1} parent=47 // pred_check_branch
              %619 = sbr.rel target = $region56
            $region55: #{tpu_custom_call.1} parent=47 // pred_region
              %s621 = sdiv.u32.pop %s608, 14
              %s622 = srem.u32.pop %s608, 14
              // While loop
              $region57: #{tpu_custom_call.1} parent=55 // loop_pre_header
                _
              $region58: #{tpu_custom_call.1} parent=55 // loop_header
                %s624 = sphi 0, %s626
                %p625 = scmp.ge.s32.totalorder %s624, %s621
                %s629 = sphi 0, %s662
                %s630 = sphi %s601, %s665
                %s631 = sphi %s612, %s666
              $region59: #{tpu_custom_call.1} parent=55 // loop_header_branch
                %628 = sbr.rel (%p625) target = $region63
              $region60: #{tpu_custom_call.1} parent=55 // loop_body
                %v632 = vld [vmem:[%s630] sm:$0xff]
                %633 = vst [vmem:[%s631] sm:$0xff] %v632
                %v634 = vld [vmem:[%s630 + $0x8] sm:$0xff]
                %635 = vst [vmem:[%s631 + $0x8] sm:$0xff] %v634
                %v636 = vld [vmem:[%s630 + $0x10] sm:$0xff]
                %637 = vst [vmem:[%s631 + $0x10] sm:$0xff] %v636
                %v638 = vld [vmem:[%s630 + $0x18] sm:$0xff]
                %639 = vst [vmem:[%s631 + $0x18] sm:$0xff] %v638
                %v640 = vld [vmem:[%s630 + $0x20] sm:$0xff]
                %641 = vst [vmem:[%s631 + $0x20] sm:$0xff] %v640
                %v642 = vld [vmem:[%s630 + $0x28] sm:$0xff]
                %643 = vst [vmem:[%s631 + $0x28] sm:$0xff] %v642
                %v644 = vld [vmem:[%s630 + $0x30] sm:$0xff]
                %645 = vst [vmem:[%s631 + $0x30] sm:$0xff] %v644
                %v646 = vld [vmem:[%s630 + $0x38] sm:$0xff]
                %647 = vst [vmem:[%s631 + $0x38] sm:$0xff] %v646
                %v648 = vld [vmem:[%s630 + $0x40] sm:$0xff]
                %649 = vst [vmem:[%s631 + $0x40] sm:$0xff] %v648
                %v650 = vld [vmem:[%s630 + $0x48] sm:$0xff]
                %651 = vst [vmem:[%s631 + $0x48] sm:$0xff] %v650
                %v652 = vld [vmem:[%s630 + $0x50] sm:$0xff]
                %653 = vst [vmem:[%s631 + $0x50] sm:$0xff] %v652
                %v654 = vld [vmem:[%s630 + $0x58] sm:$0xff]
                %655 = vst [vmem:[%s631 + $0x58] sm:$0xff] %v654
                %v656 = vld [vmem:[%s630 + $0x60] sm:$0xff]
                %657 = vst [vmem:[%s631 + $0x60] sm:$0xff] %v656
                %v658 = vld [vmem:[%s630 + $0x68] sm:$0xff]
                %659 = vst [vmem:[%s631 + $0x68] sm:$0xff] %v658
                %s660 = sadd.s32 1, %s629
                %p661 = scmp.ge.s32.totalorder %s660, %s621
                %s662 = scalar_select %p661, 0, %s660
                %s663 = smul.u32 %s662, 112
                %s664 = smul.u32 %s662, 112
                %s665 = scalar_lea.vmem %s601, %s663 [#allocation2]
                %s666 = scalar_lea.vmem %s612, %s664
              $region61: #{tpu_custom_call.1} parent=55 // loop_footer
                %s626 = sadd.s32 %s624, 1
              $region62: #{tpu_custom_call.1} parent=55 // loop_footer_branch
                %623 = sbr.rel target = $region58
              $region63: #{tpu_custom_call.1} parent=55 // loop_exit
                _
              %s667 = sdiv.u32.pop %s608, 14
              %s668 = srem.u32.pop %s608, 14
              %s669 = smul.u32 %s667, 14
              %s670 = smul.u32 8, %s669
              %s671 = scalar_lea.vmem %s601, %s670 [#allocation2]
              %s672 = smul.u32 8, %s669
              %s673 = scalar_lea.vmem %s612, %s672
              // While loop
              $region64: #{tpu_custom_call.1} parent=55 // loop_pre_header
                _
              $region65: #{tpu_custom_call.1} parent=55 // loop_header
                %s675 = sphi 0, %s677
                %p676 = scmp.ge.s32.totalorder %s675, %s668
                %s680 = sphi 0, %s687
                %s681 = sphi %s671, %s690
                %s682 = sphi %s673, %s691
              $region66: #{tpu_custom_call.1} parent=55 // loop_header_branch
                %679 = sbr.rel (%p676) target = $region70
              $region67: #{tpu_custom_call.1} parent=55 // loop_body
                %v683 = vld [vmem:[%s681] sm:$0xff]
                %684 = vst [vmem:[%s682] sm:$0xff] %v683
                %s685 = sadd.s32 1, %s680
                %p686 = scmp.ge.s32.totalorder %s685, %s668
                %s687 = scalar_select %p686, 0, %s685
                %s688 = smul.u32 %s687, 8
                %s689 = smul.u32 %s687, 8
                %s690 = scalar_lea.vmem %s671, %s688 [#allocation2]
                %s691 = scalar_lea.vmem %s673, %s689
              $region68: #{tpu_custom_call.1} parent=55 // loop_footer
                %s677 = sadd.s32 %s675, 1
              $region69: #{tpu_custom_call.1} parent=55 // loop_footer_branch
                %674 = sbr.rel target = $region65
              $region70: #{tpu_custom_call.1} parent=55 // loop_exit
                _
            $region56: #{tpu_custom_call.1} parent=47 // pred_fallthru
              _
          $region48: #{tpu_custom_call.1} parent=43 // pred_fallthru
            _
          %767 = vnop
        $region44: #{tpu_custom_call.1} parent=39 // pred_fallthru
          _
      $region40: #{tpu_custom_call.1} parent=5 // pred_fallthru
        _
      %p768 = scmp.le.s32.totalorder 2, %s11
      // Predicated region
      $region93: #{tpu_custom_call.1} parent=5 // pred_check
        %p769 = pneg %p768
      $region94: #{tpu_custom_call.1} parent=5 // pred_check_branch
        %771 = sbr.rel (%p769) target = $region96
      $region95: #{tpu_custom_call.1} parent=5 // pred_region
        %s772 = ssub.s32 %s11, 2
        // Predicated region
        $region97: #{tpu_custom_call.1} parent=95 // pred_check
          %p773 = pneg %p150
        $region98: #{tpu_custom_call.1} parent=95 // pred_check_branch
          %775 = sbr.rel (%p773) target = $region100
        $region99: #{tpu_custom_call.1} parent=95 // pred_region
          %s776 = sand.u32 %s135, 1
          %s777 = sand.u32 %s135, 1
          %s778 = smul.addr %s777, 112
          %s779 = scalar_lea.vmem [#allocation2], %s778
        $region100: #{tpu_custom_call.1} parent=95 // pred_fallthru
          _
      $region96: #{tpu_custom_call.1} parent=5 // pred_fallthru
        _
    $region6: #{tpu_custom_call.1} parent=1 // loop_footer
      %s15 = sadd.s32 1, %s11
    $region7: #{tpu_custom_call.1} parent=1 // loop_footer_branch
      %10 = sbr.rel target = $region3
    $region8: #{tpu_custom_call.1} parent=1 // loop_exit
      _

// kernel: tpu_custom_call.1
$region0: #{tpu_custom_call.1}
  #allocation0 [shape = 'u32[]', space=smem, size = 0x4, offset = 0x4, fixed_abs, tag = 'smem constant byte address 0x4 - core index']
  #allocation1 [shape = 'u32[144,128]{1,0:T(1,128)}', space=vmem, size = 0x12000, scoped, tag = 'internal scratch']
  %s0 = inlined_call_operand.vmem [shape: f32[200,32], index: 0, kind: input, shape index: {}]
  %s1 = inlined_call_operand.vmem [shape: bf16[32,128], index: 1, kind: input, shape index: {}]
  %s2 = inlined_call_operand.vmem [shape: f32[1,128], index: 2, kind: input, shape index: {}]
  %s3 = inlined_call_operand.vmem [shape: bf16[128,16], index: 3, kind: input, shape index: {}]
  %s4 = inlined_call_operand.vmem [shape: f32[1,16], index: 4, kind: input, shape index: {}]
  %s5 = inlined_call_operand.vmem [shape: f32[200,16], index: 5, kind: output, shape index: {}]
  %s6 = sld [smem:[#allocation0]]
  $region101: #{tpu_custom_call.1} parent=0
    _
  %s8 = ssub.s32 1, %s6
  %s9 = scalar_select 0, %s8, %s6
  $region1: #{tpu_custom_call.1} parent=0
    #allocation2 [shape = 'u8[114688]{0}', space=vmem, size = 0x1c000, scoped, tag = 'output window, operand 0']
    loop: start=0, step=1, limit=4
    $region2: #{tpu_custom_call.1} parent=1 // loop_pre_header
      _
    $region3: #{tpu_custom_call.1} parent=1 // loop_header
      %s11 = sphi 0, %s15
      %p12 = scmp.ge.s32.totalorder %s11, 4
      %s21 = sphi 0, %s23
      %s24 = sphi 0, %s21
      %s25 = sphi 0, %s24
      %s41 = sphi 0, %s25
      %s45 = sphi 0, %s45
      %s47 = sphi 0, %s45
      %s48 = sphi 0, %s47
      %s62 = sphi 0, %s48
      %s66 = sphi 0, %s66
      %s68 = sphi 0, %s66
      %s69 = sphi 0, %s68
      %s83 = sphi 0, %s69
      %s87 = sphi 0, %s87
      %s89 = sphi 0, %s87
      %s90 = sphi 0, %s89
      %s104 = sphi 0, %s90
      %s108 = sphi 0, %s108
      %s110 = sphi 0, %s108
      %s111 = sphi 0, %s110
      %s125 = sphi 0, %s111
      %s131 = sphi 0, %s133
      %s134 = sphi 0, %s131
      %s135 = sphi 0, %s134
      %s151 = sphi 0, %s135
    $region4: #{tpu_custom_call.1} parent=1 // loop_header_branch
      %14 = sbr.rel (%p12) target = $region8
    $region5: #{tpu_custom_call.1} parent=1 // loop_body
      %s16 = ssub.s32 %s11, 1
      %s17 = ssub.s32 %s11, 2
      %s18 = sadd.s32 %s11, 1
      %s19 = ssub.s32 %s11, %s18
      %p20 = scmp.eq.s32.totalorder %s19, 0
      %s22 = sadd.s32 %s21, 1
      %s23 = scalar_select %p20, %s21, %s22
      %p26 = pneg %p20
      %p27 = scmp.eq.s32.totalorder %s11, 1
      %p28 = por %p26, %p27
      %p29 = scmp.ne.s32.totalorder %s21, %s24
      %p30 = scmp.eq.s32.totalorder %s11, 0
      %p31 = por %p29, %p30
      %p32 = scmp.ne.s32.totalorder %s21, %s24
      %p33 = scmp.eq.s32.totalorder %s16, 1
      %p34 = por %p32, %p33
      %p35 = scmp.ne.s32.totalorder %s24, %s25
      %p36 = scmp.eq.s32.totalorder %s16, 0
      %p37 = por %p35, %p36
      %p38 = scmp.ne.s32.totalorder %s24, %s25
      %p39 = scmp.eq.s32.totalorder %s17, 1
      %p40 = por %p38, %p39
      %p42 = scmp.ne.s32.totalorder %s25, %s41
      %p43 = scmp.eq.s32.totalorder %s17, 0
      %p44 = por %p42, %p43
      %s46 = sadd.s32 %s45, 1
      %p49 = scmp.eq.s32.totalorder %s11, 1
      %p50 = scmp.ne.s32.totalorder %s45, %s47
      %p51 = scmp.eq.s32.totalorder %s11, 0
      %p52 = por %p50, %p51
      %p53 = scmp.ne.s32.totalorder %s45, %s47
      %p54 = scmp.eq.s32.totalorder %s16, 1
      %p55 = por %p53, %p54
      %p56 = scmp.ne.s32.totalorder %s47, %s48
      %p57 = scmp.eq.s32.totalorder %s16, 0
      %p58 = por %p56, %p57
      %p59 = scmp.ne.s32.totalorder %s47, %s48
      %p60 = scmp.eq.s32.totalorder %s17, 1
      %p61 = por %p59, %p60
      %p63 = scmp.ne.s32.totalorder %s48, %s62
      %p64 = scmp.eq.s32.totalorder %s17, 0
      %p65 = por %p63, %p64
      %s67 = sadd.s32 %s66, 1
      %p70 = scmp.eq.s32.totalorder %s11, 1
      %p71 = scmp.ne.s32.totalorder %s66, %s68
      %p72 = scmp.eq.s32.totalorder %s11, 0
      %p73 = por %p71, %p72
      %p74 = scmp.ne.s32.totalorder %s66, %s68
      %p75 = scmp.eq.s32.totalorder %s16, 1
      %p76 = por %p74, %p75
      %p77 = scmp.ne.s32.totalorder %s68, %s69
      %p78 = scmp.eq.s32.totalorder %s16, 0
      %p79 = por %p77, %p78
      %p80 = scmp.ne.s32.totalorder %s68, %s69
      %p81 = scmp.eq.s32.totalorder %s17, 1
      %p82 = por %p80, %p81
      %p84 = scmp.ne.s32.totalorder %s69, %s83
      %p85 = scmp.eq.s32.totalorder %s17, 0
      %p86 = por %p84, %p85
      %s88 = sadd.s32 %s87, 1
      %p91 = scmp.eq.s32.totalorder %s11, 1
      %p92 = scmp.ne.s32.totalorder %s87, %s89
      %p93 = scmp.eq.s32.totalorder %s11, 0
      %p94 = por %p92, %p93
      %p95 = scmp.ne.s32.totalorder %s87, %s89
      %p96 = scmp.eq.s32.totalorder %s16, 1
      %p97 = por %p95, %p96
      %p98 = scmp.ne.s32.totalorder %s89, %s90
      %p99 = scmp.eq.s32.totalorder %s16, 0
      %p100 = por %p98, %p99
      %p101 = scmp.ne.s32.totalorder %s89, %s90
      %p102 = scmp.eq.s32.totalorder %s17, 1
      %p103 = por %p101, %p102
      %p105 = scmp.ne.s32.totalorder %s90, %s104
      %p106 = scmp.eq.s32.totalorder %s17, 0
      %p107 = por %p105, %p106
      %s109 = sadd.s32 %s108, 1
      %p112 = scmp.eq.s32.totalorder %s11, 1
      %p113 = scmp.ne.s32.totalorder %s108, %s110
      %p114 = scmp.eq.s32.totalorder %s11, 0
      %p115 = por %p113, %p114
      %p116 = scmp.ne.s32.totalorder %s108, %s110
      %p117 = scmp.eq.s32.totalorder %s16, 1
      %p118 = por %p116, %p117
      %p119 = scmp.ne.s32.totalorder %s110, %s111
      %p120 = scmp.eq.s32.totalorder %s16, 0
      %p121 = por %p119, %p120
      %p122 = scmp.ne.s32.totalorder %s110, %s111
      %p123 = scmp.eq.s32.totalorder %s17, 1
      %p124 = por %p122, %p123
      %p126 = scmp.ne.s32.totalorder %s111, %s125
      %p127 = scmp.eq.s32.totalorder %s17, 0
      %p128 = por %p126, %p127
      %s129 = ssub.s32 %s11, %s18
      %p130 = scmp.eq.s32.totalorder %s129, 0
      %s132 = sadd.s32 %s131, 1
      %s133 = scalar_select %p130, %s131, %s132
      %p136 = pneg %p130
      %p137 = scmp.eq.s32.totalorder %s11, 1
      %p138 = por %p136, %p137
      %p139 = scmp.ne.s32.totalorder %s131, %s134
      %p140 = scmp.eq.s32.totalorder %s11, 0
      %p141 = por %p139, %p140
      %p142 = scmp.ne.s32.totalorder %s131, %s134
      %p143 = scmp.eq.s32.totalorder %s16, 1
      %p144 = por %p142, %p143
      %p145 = scmp.ne.s32.totalorder %s134, %s135
      %p146 = scmp.eq.s32.totalorder %s16, 0
      %p147 = por %p145, %p146
      %p148 = scmp.ne.s32.totalorder %s134, %s135
      %p149 = scmp.eq.s32.totalorder %s17, 1
      %p150 = por %p148, %p149
      %p152 = scmp.ne.s32.totalorder %s135, %s151
      %p153 = scmp.eq.s32.totalorder %s17, 0
      %p154 = por %p152, %p153
      %p155 = scmp.le.s32.totalorder 1, %s11
      %p156 = scmp.lt.s32.totalorder %s11, 3
      %p157 = pnand %p155, %p156
      %p158 = pneg %p157
      // Predicated region
      $region9: #{tpu_custom_call.1} parent=5 // pred_check
        _
      $region10: #{tpu_custom_call.1} parent=5 // pred_check_branch
        %160 = sbr.rel (%p157) target = $region12
      $region11: #{tpu_custom_call.1} parent=5 // pred_region
        %s161 = ssub.s32 %s11, 1
        // Predicated region
        $region13: #{tpu_custom_call.1} parent=11 // pred_check
          %p162 = pneg %p58
        $region14: #{tpu_custom_call.1} parent=11 // pred_check_branch
          %164 = sbr.rel (%p162) target = $region16
        $region15: #{tpu_custom_call.1} parent=11 // pred_region
          _
        $region16: #{tpu_custom_call.1} parent=11 // pred_fallthru
          _
        // Predicated region
        $region17: #{tpu_custom_call.1} parent=11 // pred_check
          %p165 = pneg %p79
        $region18: #{tpu_custom_call.1} parent=11 // pred_check_branch
          %167 = sbr.rel (%p165) target = $region20
        $region19: #{tpu_custom_call.1} parent=11 // pred_region
          _
        $region20: #{tpu_custom_call.1} parent=11 // pred_fallthru
          _
        // Predicated region
        $region21: #{tpu_custom_call.1} parent=11 // pred_check
          %p168 = pneg %p100
        $region22: #{tpu_custom_call.1} parent=11 // pred_check_branch
          %170 = sbr.rel (%p168) target = $region24
        $region23: #{tpu_custom_call.1} parent=11 // pred_region
          _
        $region24: #{tpu_custom_call.1} parent=11 // pred_fallthru
          _
        // Predicated region
        $region25: #{tpu_custom_call.1} parent=11 // pred_check
          %p171 = pneg %p121
        $region26: #{tpu_custom_call.1} parent=11 // pred_check_branch
          %173 = sbr.rel (%p171) target = $region28
        $region27: #{tpu_custom_call.1} parent=11 // pred_region
          _
        $region28: #{tpu_custom_call.1} parent=11 // pred_fallthru
          _
      $region12: #{tpu_custom_call.1} parent=5 // pred_fallthru
        _
      %p174 = scmp.lt.s32.totalorder %s11, 2
      // Predicated region
      $region29: #{tpu_custom_call.1} parent=5 // pred_check
        %p175 = pneg %p174
      $region30: #{tpu_custom_call.1} parent=5 // pred_check_branch
        %177 = sbr.rel (%p175) target = $region32
      $region31: #{tpu_custom_call.1} parent=5 // pred_region
        // Predicated region
        $region33: #{tpu_custom_call.1} parent=31 // pred_check
          %p178 = pneg %p31
        $region34: #{tpu_custom_call.1} parent=31 // pred_check_branch
          %180 = sbr.rel (%p178) target = $region36
        $region35: #{tpu_custom_call.1} parent=31 // pred_region
          %s181 = smul.u32 14, %s11
          %s182 = ssub.s32 25, %s181
          %p183 = scmp.lt.s32.totalorder %s182, 14
          %s184 = scalar_select %p183, %s182, 14
          %s185 = smul.u32 128, %s184
          %p186 = scmp.lt.s32.totalorder %s181, 24
          %s187 = scalar_select %p186, %s181, 24
          %s188 = smul.addr %s187, 8
          %s189 = scalar_lea.vmem %s0, %s188
          %s190 = smul.u32 14, %s11
          %s191 = ssub.s32 25, %s190
          %p192 = scmp.lt.s32.totalorder %s191, 14
          %s193 = scalar_select %p192, %s191, 14
          %s194 = smul.u32 128, %s193
        $region36: #{tpu_custom_call.1} parent=31 // pred_fallthru
          _
      $region32: #{tpu_custom_call.1} parent=5 // pred_fallthru
        _
      %p195 = scmp.le.s32.totalorder 1, %s11
      %p196 = scmp.lt.s32.totalorder %s11, 3
      %p197 = pnand %p195, %p196
      %p198 = pneg %p197
      // Predicated region
      $region37: #{tpu_custom_call.1} parent=5 // pred_check
        _
      $region38: #{tpu_custom_call.1} parent=5 // pred_check_branch
        %200 = sbr.rel (%p197) target = $region40
      $region39: #{tpu_custom_call.1} parent=5 // pred_region
        %s201 = ssub.s32 %s11, 1
        %s202 = smul.u32 14, %s16
        %s203 = ssub.s32 25, %s202
        %p204 = scmp.lt.s32.totalorder %s203, 14
        %s205 = scalar_select %p204, %s203, 14
        %s206 = smul.u32 128, %s205
        %p207 = scmp.lt.s32.totalorder %s202, 24
        %s208 = scalar_select %p207, %s202, 24
        %s209 = smul.addr %s208, 8
        %s210 = scalar_lea.vmem %s0, %s209
        %p211 = pneg %p37
        %p212 = pneg %p34
        %p213 = pneg %p58
        %p214 = pneg %p55
        %p215 = pneg %p79
        %p216 = pneg %p76
        %p217 = pneg %p100
        %p218 = pneg %p97
        %p219 = pneg %p121
        %p220 = pneg %p118
        %p221 = pneg %p147
        %p222 = pneg %p144
        %s223 = sand.u32 %s134, 1
        %s224 = sand.u32 %s134, 1
        %s225 = smul.addr %s224, 112
        %s226 = scalar_lea.vmem [#allocation2], %s225
        %s227 = smul.u32 14, %s16
        %s228 = ssub.s32 25, %s227
        %p229 = scmp.lt.s32.totalorder %s228, 14
        %s230 = scalar_select %p229, %s228, 14
        %s231 = smul.u32 128, %s230
        %p232 = scmp.lt.s32.totalorder %s227, 24
        %s233 = scalar_select %p232, %s227, 24
        %s234 = smul.addr %s233, 8
        %s235 = scalar_lea.vmem %s0, %s234
        %s236 = smul.u32 14, %s16
        %s237 = ssub.s32 25, %s236
        %p238 = scmp.lt.s32.totalorder %s237, 14
        %s239 = scalar_select %p238, %s237, 14
        %s240 = smul.u32 128, %s239
        %s241 = smul.u32 14, %s16
        %s242 = ssub.s32 25, %s241
        %p243 = scmp.lt.s32.totalorder %s242, 14
        %s244 = scalar_select %p243, %s242, 14
        %s245 = smul.u32 128, %s244
        %v247 = vld [vmem:[%s235] sm:$0xff]
        %v248 = vld [vmem:[%s235 + $0x8] sm:$0xff]
        %v249 = vld [vmem:[%s235 + $0x10] sm:$0xff]
        %v250 = vld [vmem:[%s235 + $0x18] sm:$0xff]
        %v251 = vld [vmem:[%s235 + $0x20] sm:$0xff]
        %v252 = vld [vmem:[%s235 + $0x28] sm:$0xff]
        %v253 = vld [vmem:[%s235 + $0x30] sm:$0xff]
        %v254 = vld [vmem:[%s235 + $0x38] sm:$0xff]
        %v255 = vld [vmem:[%s235 + $0x40] sm:$0xff]
        %v256 = vld [vmem:[%s235 + $0x48] sm:$0xff]
        %v257 = vld [vmem:[%s235 + $0x50] sm:$0xff]
        %v258 = vld [vmem:[%s235 + $0x58] sm:$0xff]
        %v259 = vld [vmem:[%s235 + $0x60] sm:$0xff]
        %v260 = vld [vmem:[%s235 + $0x68] sm:$0xff]
        %v261 = vpack.c.bf16 %v248, %v247
        %v262 = vpack.c.bf16 %v250, %v249
        %v263 = vpack.c.bf16 %v252, %v251
        %v264 = vpack.c.bf16 %v254, %v253
        %v265 = vpack.c.bf16 %v256, %v255
        %v266 = vpack.c.bf16 %v258, %v257
        %v267 = vpack.c.bf16 %v260, %v259
        %v268 = vld [vmem:[%s1] sm:$0xf]
        %v269 = vld [vmem:[%s1 + $0x4] sm:$0xf]
        %v270 = vld [vmem:[%s1 + $0x8] sm:$0xf]
        %v271 = vld [vmem:[%s1 + $0xc] sm:$0xf]
        %v272 = vld [vmem:[%s2] sm:$0x1]
        %v274 = vlaneseq
        %v275 = vshrl.u32 %v274, 7
        %v276 = vsub.s32 0, %v275
        %v277 = vrot.slane %v272, %v276
        %v283 = vunpack.c.l.b16 %v268
        %v284 = vunpack.c.l.b16 %v269
        %v285 = vunpack.c.l.b16 %v270
        %v286 = vunpack.c.l.b16 %v271
        %v287 = vpack.c.b16 %v284, %v283
        %v288 = vpack.c.b16 %v286, %v285
        %vm291 = vcmask 261120
        %v293 = vsel %vm291, %v261, 0
        %v296 = vsel %vm291, %v262, 0
        %v299 = vsel %vm291, %v263, 0
        %v302 = vsel %vm291, %v264, 0
        %v305 = vsel %vm291, %v265, 0
        %v308 = vsel %vm291, %v266, 0
        %v311 = vsel %vm291, %v267, 0
        %313 = vmatprep.subr.bf16.mxu0 0
        %314 = vmatpush1.bf16.msra.mxu0 %v287
        %315 = vmatprep.subr.bf16.mxu0 0
        %316 = vmatpush1.bf16.msra.mxu0 %v288
        %317 = vmatprep.subr.bf16.mxu0 0
        %318 = vmatpush1.bf16.msra.mxu0 0
        %319 = vmatprep.subr.bf16.mxu0 0
        %320 = vmatpush1.bf16.msra.mxu0 0
        %321 = vmatprep.subr.bf16.mxu0 0
        %322 = vmatpush1.bf16.msra.mxu0 0
        %323 = vmatprep.subr.bf16.mxu0 0
        %324 = vmatpush1.bf16.msra.mxu0 0
        %325 = vmatprep.subr.bf16.mxu0 0
        %326 = vmatpush1.bf16.msra.mxu0 0
        %327 = vmatprep.subr.bf16.mxu0 0
        %328 = vmatpush1.bf16.msra.mxu0 0
        %329 = vmatprep.subr.bf16.mxu0 0
        %330 = vmatpush1.bf16.msra.mxu0 0
        %331 = vmatprep.subr.bf16.mxu0 0
        %332 = vmatpush1.bf16.msra.mxu0 0
        %333 = vmatprep.subr.bf16.mxu0 0
        %334 = vmatpush1.bf16.msra.mxu0 0
        %335 = vmatprep.subr.bf16.mxu0 0
        %336 = vmatpush1.bf16.msra.mxu0 0
        %337 = vmatprep.subr.bf16.mxu0 0
        %338 = vmatpush1.bf16.msra.mxu0 0
        %339 = vmatprep.subr.bf16.mxu0 0
        %340 = vmatpush1.bf16.msra.mxu0 0
        %341 = vmatprep.subr.bf16.mxu0 0
        %342 = vmatpush1.bf16.msra.mxu0 0
        %343 = vmatprep.subr.bf16.mxu0 0
        %344 = vmatpush1.bf16.msra.mxu0 0
        %345 = vmatprep.mubr.bf16.mxu0 0
        %346 = vmatmul.mubr.bf16.gmra.mrb[0].mxu0 %v293
        %v347 = vpop.f32.mrb[0].mxu0
        %v348 = vadd.f32 %v277, %v347
        %v349 = vpop.f32.mrb[0].mxu0
        %v350 = vpop.f32.mrb[0].mxu0
        %v351 = vadd.f32 %v277, %v350
        %v352 = vpop.f32.mrb[0].mxu0
        %353 = vmatprep.mubr.bf16.mxu0 0
        %354 = vmatmul.mubr.bf16.gmra.mrb[0].mxu0 %v296
        %v355 = vpop.f32.mrb[0].mxu0
        %v356 = vadd.f32 %v277, %v355
        %v357 = vpop.f32.mrb[0].mxu0
        %v358 = vpop.f32.mrb[0].mxu0
        %v359 = vadd.f32 %v277, %v358
        %v360 = vpop.f32.mrb[0].mxu0
        %361 = vmatprep.mubr.bf16.mxu0 0
        %362 = vmatmul.mubr.bf16.gmra.mrb[0].mxu0 %v299
        %v363 = vpop.f32.mrb[0].mxu0
        %v364 = vadd.f32 %v277, %v363
        %v365 = vpop.f32.mrb[0].mxu0
        %v366 = vpop.f32.mrb[0].mxu0
        %v367 = vadd.f32 %v277, %v366
        %v368 = vpop.f32.mrb[0].mxu0
        %369 = vmatprep.mubr.bf16.mxu0 0
        %370 = vmatmul.mubr.bf16.gmra.mrb[0].mxu0 %v302
        %v371 = vpop.f32.mrb[0].mxu0
        %v372 = vadd.f32 %v277, %v371
        %v373 = vpop.f32.mrb[0].mxu0
        %v374 = vpop.f32.mrb[0].mxu0
        %v375 = vadd.f32 %v277, %v374
        %v376 = vpop.f32.mrb[0].mxu0
        %377 = vmatprep.mubr.bf16.mxu0 0
        %378 = vmatmul.mubr.bf16.gmra.mrb[0].mxu0 %v305
        %v379 = vpop.f32.mrb[0].mxu0
        %v380 = vadd.f32 %v277, %v379
        %v381 = vpop.f32.mrb[0].mxu0
        %v382 = vpop.f32.mrb[0].mxu0
        %v383 = vadd.f32 %v277, %v382
        %v384 = vpop.f32.mrb[0].mxu0
        %385 = vmatprep.mubr.bf16.mxu0 0
        %386 = vmatmul.mubr.bf16.gmra.mrb[0].mxu0 %v308
        %v387 = vpop.f32.mrb[0].mxu0
        %v388 = vadd.f32 %v277, %v387
        %v389 = vpop.f32.mrb[0].mxu0
        %v390 = vpop.f32.mrb[0].mxu0
        %v391 = vadd.f32 %v277, %v390
        %v392 = vpop.f32.mrb[0].mxu0
        %393 = vmatprep.mubr.bf16.mxu0 0
        %394 = vmatmul.mubr.bf16.gmra.mrb[0].mxu0 %v311
        %v395 = vpop.f32.mrb[0].mxu0
        %v396 = vadd.f32 %v277, %v395
        %v397 = vpop.f32.mrb[0].mxu0
        %v398 = vpop.f32.mrb[0].mxu0
        %v399 = vadd.f32 %v277, %v398
        %v400 = vpop.f32.mrb[0].mxu0
        %401 = vdwg.mxu0
        %v402 = vmax.f32 %v348, 0.0
        %v403 = vmax.f32 %v351, 0.0
        %v404 = vmax.f32 %v356, 0.0
        %v405 = vmax.f32 %v359, 0.0
        %v406 = vmax.f32 %v364, 0.0
        %v407 = vmax.f32 %v367, 0.0
        %v408 = vmax.f32 %v372, 0.0
        %v409 = vmax.f32 %v375, 0.0
        %v410 = vmax.f32 %v380, 0.0
        %v411 = vmax.f32 %v383, 0.0
        %v412 = vmax.f32 %v388, 0.0
        %v413 = vmax.f32 %v391, 0.0
        %v414 = vmax.f32 %v396, 0.0
        %v415 = vmax.f32 %v399, 0.0
        %v416 = vpack.c.bf16 %v403, %v402
        %v417 = vpack.c.bf16 %v405, %v404
        %v418 = vpack.c.bf16 %v407, %v406
        %v419 = vpack.c.bf16 %v409, %v408
        %v420 = vpack.c.bf16 %v411, %v410
        %v421 = vpack.c.bf16 %v413, %v412
        %v422 = vpack.c.bf16 %v415, %v414
        %v423 = vld [vmem:[%s3] sm:$0xf]
        %v424 = vld [vmem:[%s3 + $0x4] sm:$0xf]
        %v425 = vld [vmem:[%s3 + $0x8] sm:$0xf]
        %v426 = vld [vmem:[%s3 + $0xc] sm:$0xf]
        %v427 = vld [vmem:[%s3 + $0x10] sm:$0xf]
        %v428 = vld [vmem:[%s3 + $0x14] sm:$0xf]
        %v429 = vld [vmem:[%s3 + $0x18] sm:$0xf]
        %v430 = vld [vmem:[%s3 + $0x1c] sm:$0xf]
        %v431 = vld [vmem:[%s3 + $0x20] sm:$0xf]
        %v432 = vld [vmem:[%s3 + $0x24] sm:$0xf]
        %v433 = vld [vmem:[%s3 + $0x28] sm:$0xf]
        %v434 = vld [vmem:[%s3 + $0x2c] sm:$0xf]
        %v435 = vld [vmem:[%s3 + $0x30] sm:$0xf]
        %v436 = vld [vmem:[%s3 + $0x34] sm:$0xf]
        %v437 = vld [vmem:[%s3 + $0x38] sm:$0xf]
        %v438 = vld [vmem:[%s3 + $0x3c] sm:$0xf]
        %v439 = vld [vmem:[%s4] sm:$0x1]
        %v441 = vlaneseq
        %v442 = vshrl.u32 %v441, 7
        %v443 = vsub.s32 0, %v442
        %v444 = vrot.slane %v439, %v443
        %v462 = vunpack.c.l.b16 %v423
        %v463 = vunpack.c.l.b16 %v424
        %v464 = vunpack.c.l.b16 %v425
        %v465 = vunpack.c.l.b16 %v426
        %v466 = vunpack.c.l.b16 %v427
        %v467 = vunpack.c.l.b16 %v428
        %v468 = vunpack.c.l.b16 %v429
        %v469 = vunpack.c.l.b16 %v430
        %v470 = vunpack.c.l.b16 %v431
        %v471 = vunpack.c.l.b16 %v432
        %v472 = vunpack.c.l.b16 %v433
        %v473 = vunpack.c.l.b16 %v434
        %v474 = vunpack.c.l.b16 %v435
        %v475 = vunpack.c.l.b16 %v436
        %v476 = vunpack.c.l.b16 %v437
        %v477 = vunpack.c.l.b16 %v438
        %v478 = vpack.c.b16 %v463, %v462
        %v479 = vpack.c.b16 %v465, %v464
        %v480 = vpack.c.b16 %v467, %v466
        %v481 = vpack.c.b16 %v469, %v468
        %v482 = vpack.c.b16 %v471, %v470
        %v483 = vpack.c.b16 %v473, %v472
        %v484 = vpack.c.b16 %v475, %v474
        %v485 = vpack.c.b16 %v477, %v476
        %494 = vmatprep.subr.bf16.mxu0 0
        %495 = vmatpush1.bf16.msra.mxu0 %v478
        %496 = vmatprep.subr.bf16.mxu0 0
        %497 = vmatpush1.bf16.msra.mxu0 %v479
        %498 = vmatprep.subr.bf16.mxu0 0
        %499 = vmatpush1.bf16.msra.mxu0 %v480
        %500 = vmatprep.subr.bf16.mxu0 0
        %501 = vmatpush1.bf16.msra.mxu0 %v481
        %502 = vmatprep.subr.bf16.mxu0 0
        %503 = vmatpush1.bf16.msra.mxu0 %v482
        %504 = vmatprep.subr.bf16.mxu0 0
        %505 = vmatpush1.bf16.msra.mxu0 %v483
        %506 = vmatprep.subr.bf16.mxu0 0
        %507 = vmatpush1.bf16.msra.mxu0 %v484
        %508 = vmatprep.subr.bf16.mxu0 0
        %509 = vmatpush1.bf16.msra.mxu0 %v485
        %510 = vmatprep.subr.bf16.mxu0 0
        %511 = vmatpush1.bf16.msra.mxu0 0
        %512 = vmatprep.subr.bf16.mxu0 0
        %513 = vmatpush1.bf16.msra.mxu0 0
        %514 = vmatprep.subr.bf16.mxu0 0
        %515 = vmatpush1.bf16.msra.mxu0 0
        %516 = vmatprep.subr.bf16.mxu0 0
        %517 = vmatpush1.bf16.msra.mxu0 0
        %518 = vmatprep.subr.bf16.mxu0 0
        %519 = vmatpush1.bf16.msra.mxu0 0
        %520 = vmatprep.subr.bf16.mxu0 0
        %521 = vmatpush1.bf16.msra.mxu0 0
        %522 = vmatprep.subr.bf16.mxu0 0
        %523 = vmatpush1.bf16.msra.mxu0 0
        %524 = vmatprep.subr.bf16.mxu0 0
        %525 = vmatpush1.bf16.msra.mxu0 0
        %526 = vmatprep.mubr.bf16.mxu0 0
        %527 = vmatmul.mubr.bf16.gmra.mrb[0].mxu0 %v416
        %v528 = vpop.f32.mrb[0].mxu0
        %v529 = vadd.f32 %v444, %v528
        %v530 = vpop.f32.mrb[0].mxu0
        %v531 = vpop.f32.mrb[0].mxu0
        %v532 = vadd.f32 %v444, %v531
        %v533 = vpop.f32.mrb[0].mxu0
        %534 = vmatprep.mubr.bf16.mxu0 0
        %535 = vmatmul.mubr.bf16.gmra.mrb[0].mxu0 %v417
        %v536 = vpop.f32.mrb[0].mxu0
        %v537 = vadd.f32 %v444, %v536
        %v538 = vpop.f32.mrb[0].mxu0
        %v539 = vpop.f32.mrb[0].mxu0
        %v540 = vadd.f32 %v444, %v539
        %v541 = vpop.f32.mrb[0].mxu0
        %542 = vmatprep.mubr.bf16.mxu0 0
        %543 = vmatmul.mubr.bf16.gmra.mrb[0].mxu0 %v418
        %v544 = vpop.f32.mrb[0].mxu0
        %v545 = vadd.f32 %v444, %v544
        %v546 = vpop.f32.mrb[0].mxu0
        %v547 = vpop.f32.mrb[0].mxu0
        %v548 = vadd.f32 %v444, %v547
        %v549 = vpop.f32.mrb[0].mxu0
        %550 = vmatprep.mubr.bf16.mxu0 0
        %551 = vmatmul.mubr.bf16.gmra.mrb[0].mxu0 %v419
        %v552 = vpop.f32.mrb[0].mxu0
        %v553 = vadd.f32 %v444, %v552
        %v554 = vpop.f32.mrb[0].mxu0
        %v555 = vpop.f32.mrb[0].mxu0
        %v556 = vadd.f32 %v444, %v555
        %v557 = vpop.f32.mrb[0].mxu0
        %558 = vmatprep.mubr.bf16.mxu0 0
        %559 = vmatmul.mubr.bf16.gmra.mrb[0].mxu0 %v420
        %v560 = vpop.f32.mrb[0].mxu0
        %v561 = vadd.f32 %v444, %v560
        %v562 = vpop.f32.mrb[0].mxu0
        %v563 = vpop.f32.mrb[0].mxu0
        %v564 = vadd.f32 %v444, %v563
        %v565 = vpop.f32.mrb[0].mxu0
        %566 = vmatprep.mubr.bf16.mxu0 0
        %567 = vmatmul.mubr.bf16.gmra.mrb[0].mxu0 %v421
        %v568 = vpop.f32.mrb[0].mxu0
        %v569 = vadd.f32 %v444, %v568
        %v570 = vpop.f32.mrb[0].mxu0
        %v571 = vpop.f32.mrb[0].mxu0
        %v572 = vadd.f32 %v444, %v571
        %v573 = vpop.f32.mrb[0].mxu0
        %574 = vmatprep.mubr.bf16.mxu0 0
        %575 = vmatmul.mubr.bf16.gmra.mrb[0].mxu0 %v422
        %v576 = vpop.f32.mrb[0].mxu0
        %v577 = vadd.f32 %v444, %v576
        %v578 = vpop.f32.mrb[0].mxu0
        %v579 = vpop.f32.mrb[0].mxu0
        %v580 = vadd.f32 %v444, %v579
        %v581 = vpop.f32.mrb[0].mxu0
        %582 = vdwg.mxu0
        %vm583 = vcmask 130048
        %584 = vst.msk [vmem:[%s226] sm:$0xff] %vm583, %v529
        %585 = vst.msk [vmem:[%s226 + $0x8] sm:$0xff] %vm583, %v532
        %586 = vst.msk [vmem:[%s226 + $0x10] sm:$0xff] %vm583, %v537
        %587 = vst.msk [vmem:[%s226 + $0x18] sm:$0xff] %vm583, %v540
        %588 = vst.msk [vmem:[%s226 + $0x20] sm:$0xff] %vm583, %v545
        %589 = vst.msk [vmem:[%s226 + $0x28] sm:$0xff] %vm583, %v548
        %590 = vst.msk [vmem:[%s226 + $0x30] sm:$0xff] %vm583, %v553
        %591 = vst.msk [vmem:[%s226 + $0x38] sm:$0xff] %vm583, %v556
        %592 = vst.msk [vmem:[%s226 + $0x40] sm:$0xff] %vm583, %v561
        %593 = vst.msk [vmem:[%s226 + $0x48] sm:$0xff] %vm583, %v564
        %594 = vst.msk [vmem:[%s226 + $0x50] sm:$0xff] %vm583, %v569
        %595 = vst.msk [vmem:[%s226 + $0x58] sm:$0xff] %vm583, %v572
        %596 = vst.msk [vmem:[%s226 + $0x60] sm:$0xff] %vm583, %v577
        %597 = vst.msk [vmem:[%s226 + $0x68] sm:$0xff] %vm583, %v580
        %s598 = sand.u32 %s134, 1
        %s599 = sand.u32 %s134, 1
        %s600 = smul.addr %s599, 112
        %s601 = scalar_lea.vmem [#allocation2], %s600
        // Predicated region
        $region41: #{tpu_custom_call.1} parent=39 // pred_check
          %p602 = pneg %p144
        $region42: #{tpu_custom_call.1} parent=39 // pred_check_branch
          %604 = sbr.rel (%p602) target = $region44
        $region43: #{tpu_custom_call.1} parent=39 // pred_region
          %s605 = smul.u32 14, %s16
          %s606 = ssub.s32 25, %s605
          %p607 = scmp.lt.s32.totalorder %s606, 14
          %s608 = scalar_select %p607, %s606, 14
          %s609 = smul.u32 128, %s608
          %p610 = scmp.ne.s32.totalorder 0, %s609
          %s611 = smul.addr %s605, 8
          %s612 = scalar_lea.vmem %s5, %s611
          // Predicated region
          $region45: #{tpu_custom_call.1} parent=43 // pred_check
            %p613 = pneg %p610
          $region46: #{tpu_custom_call.1} parent=43 // pred_check_branch
            %615 = sbr.rel (%p613) target = $region48
          $region47: #{tpu_custom_call.1} parent=43 // pred_region
            // Predicated region
            $region49: #{tpu_custom_call.1} parent=47 // pred_check
              _
            $region50: #{tpu_custom_call.1} parent=47 // pred_check_branch
              %617 = sbr.rel (0) target = $region52
            $region51: #{tpu_custom_call.1} parent=47 // pred_region
              // Predicated region
              $region71: #{tpu_custom_call.1} parent=51 // pred_check
                _
              $region72: #{tpu_custom_call.1} parent=51 // pred_check_branch
                %693 = sbr.rel (0) target = $region74
              $region73: #{tpu_custom_call.1} parent=51 // pred_region
                %s694 = sdiv.u32.pop %s608, 14
                %s695 = srem.u32.pop %s608, 14
                // While loop
                $region75: #{tpu_custom_call.1} parent=73 // loop_pre_header
                  _
                $region76: #{tpu_custom_call.1} parent=73 // loop_header
                  %s697 = sphi 0, %s699
                  %p698 = scmp.ge.s32.totalorder %s697, %s694
                  %s702 = sphi 0, %s735
                  %s703 = sphi %s601, %s738
                  %s704 = sphi %s612, %s739
                $region77: #{tpu_custom_call.1} parent=73 // loop_header_branch
                  %701 = sbr.rel (%p698) target = $region81
                $region78: #{tpu_custom_call.1} parent=73 // loop_body
                  %v705 = vld [vmem:[%s703] sm:$0xff]
                  %706 = vst [vmem:[%s704] sm:$0xff] %v705
                  %v707 = vld [vmem:[%s703 + $0x8] sm:$0xff]
                  %708 = vst [vmem:[%s704 + $0x8] sm:$0xff] %v707
                  %v709 = vld [vmem:[%s703 + $0x10] sm:$0xff]
                  %710 = vst [vmem:[%s704 + $0x10] sm:$0xff] %v709
                  %v711 = vld [vmem:[%s703 + $0x18] sm:$0xff]
                  %712 = vst [vmem:[%s704 + $0x18] sm:$0xff] %v711
                  %v713 = vld [vmem:[%s703 + $0x20] sm:$0xff]
                  %714 = vst [vmem:[%s704 + $0x20] sm:$0xff] %v713
                  %v715 = vld [vmem:[%s703 + $0x28] sm:$0xff]
                  %716 = vst [vmem:[%s704 + $0x28] sm:$0xff] %v715
                  %v717 = vld [vmem:[%s703 + $0x30] sm:$0xff]
                  %718 = vst [vmem:[%s704 + $0x30] sm:$0xff] %v717
                  %v719 = vld [vmem:[%s703 + $0x38] sm:$0xff]
                  %720 = vst [vmem:[%s704 + $0x38] sm:$0xff] %v719
                  %v721 = vld [vmem:[%s703 + $0x40] sm:$0xff]
                  %722 = vst [vmem:[%s704 + $0x40] sm:$0xff] %v721
                  %v723 = vld [vmem:[%s703 + $0x48] sm:$0xff]
                  %724 = vst [vmem:[%s704 + $0x48] sm:$0xff] %v723
                  %v725 = vld [vmem:[%s703 + $0x50] sm:$0xff]
                  %726 = vst [vmem:[%s704 + $0x50] sm:$0xff] %v725
                  %v727 = vld [vmem:[%s703 + $0x58] sm:$0xff]
                  %728 = vst [vmem:[%s704 + $0x58] sm:$0xff] %v727
                  %v729 = vld [vmem:[%s703 + $0x60] sm:$0xff]
                  %730 = vst [vmem:[%s704 + $0x60] sm:$0xff] %v729
                  %v731 = vld [vmem:[%s703 + $0x68] sm:$0xff]
                  %732 = vst [vmem:[%s704 + $0x68] sm:$0xff] %v731
                  %s733 = sadd.s32 1, %s702
                  %p734 = scmp.ge.s32.totalorder %s733, %s694
                  %s735 = scalar_select %p734, 0, %s733
                  %s736 = smul.u32 %s735, 112
                  %s737 = smul.u32 %s735, 112
                  %s738 = scalar_lea.vmem %s601, %s736 [#allocation2]
                  %s739 = scalar_lea.vmem %s612, %s737
                $region79: #{tpu_custom_call.1} parent=73 // loop_footer
                  %s699 = sadd.s32 %s697, 1
                $region80: #{tpu_custom_call.1} parent=73 // loop_footer_branch
                  %696 = sbr.rel target = $region76
                $region81: #{tpu_custom_call.1} parent=73 // loop_exit
                  _
                %s740 = sdiv.u32.pop %s608, 14
                %s741 = srem.u32.pop %s608, 14
                %s742 = smul.u32 %s740, 14
                %s743 = smul.u32 8, %s742
                %s744 = scalar_lea.vmem %s601, %s743 [#allocation2]
                %s745 = smul.u32 8, %s742
                %s746 = scalar_lea.vmem %s612, %s745
                // While loop
                $region82: #{tpu_custom_call.1} parent=73 // loop_pre_header
                  _
                $region83: #{tpu_custom_call.1} parent=73 // loop_header
                  %s748 = sphi 0, %s750
                  %p749 = scmp.ge.s32.totalorder %s748, %s741
                  %s753 = sphi 0, %s760
                  %s754 = sphi %s744, %s763
                  %s755 = sphi %s746, %s764
                $region84: #{tpu_custom_call.1} parent=73 // loop_header_branch
                  %752 = sbr.rel (%p749) target = $region88
                $region85: #{tpu_custom_call.1} parent=73 // loop_body
                  %v756 = vld [vmem:[%s754] sm:$0xff]
                  %757 = vst [vmem:[%s755] sm:$0xff] %v756
                  %s758 = sadd.s32 1, %s753
                  %p759 = scmp.ge.s32.totalorder %s758, %s741
                  %s760 = scalar_select %p759, 0, %s758
                  %s761 = smul.u32 %s760, 8
                  %s762 = smul.u32 %s760, 8
                  %s763 = scalar_lea.vmem %s744, %s761 [#allocation2]
                  %s764 = scalar_lea.vmem %s746, %s762
                $region86: #{tpu_custom_call.1} parent=73 // loop_footer
                  %s750 = sadd.s32 %s748, 1
                $region87: #{tpu_custom_call.1} parent=73 // loop_footer_branch
                  %747 = sbr.rel target = $region83
                $region88: #{tpu_custom_call.1} parent=73 // loop_exit
                  _
              $region74: #{tpu_custom_call.1} parent=51 // pred_fallthru
                _
              // Predicated region
              $region89: #{tpu_custom_call.1} parent=51 // pred_check
                _
              $region90: #{tpu_custom_call.1} parent=51 // pred_check_branch
                %766 = sbr.rel target = $region92
              $region91: #{tpu_custom_call.1} parent=51 // pred_region
                _
              $region92: #{tpu_custom_call.1} parent=51 // pred_fallthru
                _
            $region52: #{tpu_custom_call.1} parent=47 // pred_fallthru
              _
            // Predicated region
            $region53: #{tpu_custom_call.1} parent=47 // pred_check
              _
            $region54: #{tpu_custom_call.1} parent=47 // pred_check_branch
              %619 = sbr.rel target = $region56
            $region55: #{tpu_custom_call.1} parent=47 // pred_region
              %s621 = sdiv.u32.pop %s608, 14
              %s622 = srem.u32.pop %s608, 14
              // While loop
              $region57: #{tpu_custom_call.1} parent=55 // loop_pre_header
                _
              $region58: #{tpu_custom_call.1} parent=55 // loop_header
                %s624 = sphi 0, %s626
                %p625 = scmp.ge.s32.totalorder %s624, %s621
                %s629 = sphi 0, %s662
                %s630 = sphi %s601, %s665
                %s631 = sphi %s612, %s666
              $region59: #{tpu_custom_call.1} parent=55 // loop_header_branch
                %628 = sbr.rel (%p625) target = $region63
              $region60: #{tpu_custom_call.1} parent=55 // loop_body
                %v632 = vld [vmem:[%s630] sm:$0xff]
                %633 = vst [vmem:[%s631] sm:$0xff] %v632
                %v634 = vld [vmem:[%s630 + $0x8] sm:$0xff]
                %635 = vst [vmem:[%s631 + $0x8] sm:$0xff] %v634
                %v636 = vld [vmem:[%s630 + $0x10] sm:$0xff]
                %637 = vst [vmem:[%s631 + $0x10] sm:$0xff] %v636
                %v638 = vld [vmem:[%s630 + $0x18] sm:$0xff]
                %639 = vst [vmem:[%s631 + $0x18] sm:$0xff] %v638
                %v640 = vld [vmem:[%s630 + $0x20] sm:$0xff]
                %641 = vst [vmem:[%s631 + $0x20] sm:$0xff] %v640
                %v642 = vld [vmem:[%s630 + $0x28] sm:$0xff]
                %643 = vst [vmem:[%s631 + $0x28] sm:$0xff] %v642
                %v644 = vld [vmem:[%s630 + $0x30] sm:$0xff]
                %645 = vst [vmem:[%s631 + $0x30] sm:$0xff] %v644
                %v646 = vld [vmem:[%s630 + $0x38] sm:$0xff]
                %647 = vst [vmem:[%s631 + $0x38] sm:$0xff] %v646
                %v648 = vld [vmem:[%s630 + $0x40] sm:$0xff]
                %649 = vst [vmem:[%s631 + $0x40] sm:$0xff] %v648
                %v650 = vld [vmem:[%s630 + $0x48] sm:$0xff]
                %651 = vst [vmem:[%s631 + $0x48] sm:$0xff] %v650
                %v652 = vld [vmem:[%s630 + $0x50] sm:$0xff]
                %653 = vst [vmem:[%s631 + $0x50] sm:$0xff] %v652
                %v654 = vld [vmem:[%s630 + $0x58] sm:$0xff]
                %655 = vst [vmem:[%s631 + $0x58] sm:$0xff] %v654
                %v656 = vld [vmem:[%s630 + $0x60] sm:$0xff]
                %657 = vst [vmem:[%s631 + $0x60] sm:$0xff] %v656
                %v658 = vld [vmem:[%s630 + $0x68] sm:$0xff]
                %659 = vst [vmem:[%s631 + $0x68] sm:$0xff] %v658
                %s660 = sadd.s32 1, %s629
                %p661 = scmp.ge.s32.totalorder %s660, %s621
                %s662 = scalar_select %p661, 0, %s660
                %s663 = smul.u32 %s662, 112
                %s664 = smul.u32 %s662, 112
                %s665 = scalar_lea.vmem %s601, %s663 [#allocation2]
                %s666 = scalar_lea.vmem %s612, %s664
              $region61: #{tpu_custom_call.1} parent=55 // loop_footer
                %s626 = sadd.s32 %s624, 1
              $region62: #{tpu_custom_call.1} parent=55 // loop_footer_branch
                %623 = sbr.rel target = $region58
              $region63: #{tpu_custom_call.1} parent=55 // loop_exit
                _
              %s667 = sdiv.u32.pop %s608, 14
              %s668 = srem.u32.pop %s608, 14
              %s669 = smul.u32 %s667, 14
              %s670 = smul.u32 8, %s669
              %s671 = scalar_lea.vmem %s601, %s670 [#allocation2]
              %s672 = smul.u32 8, %s669
              %s673 = scalar_lea.vmem %s612, %s672
              // While loop
              $region64: #{tpu_custom_call.1} parent=55 // loop_pre_header
                _
              $region65: #{tpu_custom_call.1} parent=55 // loop_header
                %s675 = sphi 0, %s677
                %p676 = scmp.ge.s32.totalorder %s675, %s668
                %s680 = sphi 0, %s687
                %s681 = sphi %s671, %s690
                %s682 = sphi %s673, %s691
              $region66: #{tpu_custom_call.1} parent=55 // loop_header_branch
                %679 = sbr.rel (%p676) target = $region70
              $region67: #{tpu_custom_call.1} parent=55 // loop_body
                %v683 = vld [vmem:[%s681] sm:$0xff]
                %684 = vst [vmem:[%s682] sm:$0xff] %v683
                %s685 = sadd.s32 1, %s680
                %p686 = scmp.ge.s32.totalorder %s685, %s668
                %s687 = scalar_select %p686, 0, %s685
                %s688 = smul.u32 %s687, 8
                %s689 = smul.u32 %s687, 8
                %s690 = scalar_lea.vmem %s671, %s688 [#allocation2]
                %s691 = scalar_lea.vmem %s673, %s689
              $region68: #{tpu_custom_call.1} parent=55 // loop_footer
                %s677 = sadd.s32 %s675, 1
              $region69: #{tpu_custom_call.1} parent=55 // loop_footer_branch
                %674 = sbr.rel target = $region65
              $region70: #{tpu_custom_call.1} parent=55 // loop_exit
                _
            $region56: #{tpu_custom_call.1} parent=47 // pred_fallthru
              _
          $region48: #{tpu_custom_call.1} parent=43 // pred_fallthru
            _
          %767 = vnop
        $region44: #{tpu_custom_call.1} parent=39 // pred_fallthru
          _
      $region40: #{tpu_custom_call.1} parent=5 // pred_fallthru
        _
      %p768 = scmp.le.s32.totalorder 2, %s11
      // Predicated region
      $region93: #{tpu_custom_call.1} parent=5 // pred_check
        %p769 = pneg %p768
      $region94: #{tpu_custom_call.1} parent=5 // pred_check_branch
        %771 = sbr.rel (%p769) target = $region96
      $region95: #{tpu_custom_call.1} parent=5 // pred_region
        %s772 = ssub.s32 %s11, 2
        // Predicated region
        $region97: #{tpu_custom_call.1} parent=95 // pred_check
          %p773 = pneg %p150
        $region98: #{tpu_custom_call.1} parent=95 // pred_check_branch
          %775 = sbr.rel (%p773) target = $region100
        $region99: #{tpu_custom_call.1} parent=95 // pred_region
          %s776 = sand.u32 %s135, 1
          %s777 = sand.u32 %s135, 1
          %s778 = smul.addr %s777, 112
          %s779 = scalar_lea.vmem [#allocation2], %s778
        $region100: #{tpu_custom_call.1} parent=95 // pred_fallthru
          _
      $region96: #{tpu_custom_call.1} parent=5 // pred_fallthru
        _
    $region6: #{tpu_custom_call.1} parent=1 // loop_footer
      %s15 = sadd.s32 1, %s11
    $region7: #{tpu_custom_call.1} parent=1 // loop_footer_branch
      %10 = sbr.rel target = $region3
    $region8: #{tpu_custom_call.1} parent=1 // loop_exit
      _

</llo_original>
